<compile_context>
chip_gen: v7x
topology: tpu7x:2x2x1
jax: 0.10.0
libtpu: 0.0.40
codegen_flags: <defaults>
</compile_context>

<pallas_src>
import numpy as np
import jax
import jax.numpy as jnp
from jax import lax
from jax.experimental import pallas as pl
from jax.experimental.pallas import tpu as pltpu

EPS = 1e-5


def _round_up(a, m):
    return (a + m - 1) // m * m


def _vmem_limit_bytes():
    # cap - 16 MiB headroom, clamped to 112 MiB on 128 MiB parts (v5e/v6e);
    # on v7x (64 MiB) this yields ~48 MiB.  Conservative fallback on failure.
    cap = None
    try:
        cap = getattr(pltpu.get_tpu_info(), "vmem_capacity_bytes", None)
    except Exception:
        cap = None
    if not cap:
        return 48 * 1024 * 1024
    return int(min(cap - 16 * 1024 * 1024, 112 * 1024 * 1024))


def _make_tcn_kernel(n_blocks, B, L1p, R, Hp, inv_n, inv_L1):
    """Builds the kernel for a TCN with `n_blocks` residual blocks."""

    def kernel(*refs):
        x_ref, w1_ref, g1_ref, be1_ref = refs[0:4]
        blk_refs = refs[4:4 + 10 * n_blocks]
        (wl_ref, bl_ref, mprev_ref, mnext_ref, mvalid_ref,
         o_ref) = refs[4 + 10 * n_blocks:]

        f32, bf16 = jnp.float32, jnp.bfloat16

        # Hoisted full-width masks: broadcast ONCE in the preamble and reuse in
        # every conv/BN (JAX does not CSE broadcast_in_dim, so doing this inside
        # the block loop re-emits the broadcasts 6*n_blocks times).
        mprev_w = jnp.broadcast_to(mprev_ref[...], (R, Hp))   # 0 at l == 0
        mnext_w = jnp.broadcast_to(mnext_ref[...], (R, Hp))   # 0 at l == L1-1
        mv_w = jnp.broadcast_to(mvalid_ref[...], (R, Hp))     # 0 on padding rows

        def bn_relu(y, g_ref, be_ref):
            # Training-mode BatchNorm folded into per-channel scale/shift + ReLU.
            # Stats are computed on a pivot-centered, padding-masked copy of y:
            #   - mv_w zeroes padding rows so plain sums * inv_n give the batch
            #     stats over the real B*L1 rows only (invariant: keep this mask);
            #   - subtracting the row-0 pivot (a valid row) reduces the
            #     E[x^2]-E[x]^2 cancellation of the one-pass variance.
            p = y[0:1, :]
            yc = (y - p) * mv_w
            s = jnp.sum(yc, axis=0, keepdims=True)
            ss = jnp.sum(yc * yc, axis=0, keepdims=True)
            mean_c = s * inv_n
            var = ss * inv_n - mean_c * mean_c
            scale = g_ref[...] * lax.rsqrt(var + EPS)
            shift = be_ref[...] - (mean_c + p) * scale
            return jnp.maximum(y * scale + shift, 0.0).astype(bf16)

        def conv3(h_bf, wp_ref, wm_ref, wn_ref):
            # k=3, stride=1, pad=1 conv as three accumulating (Hp, Hp) per-tap
            # matmuls (no lane-concat, no (R,3Hp) temp).  Tap shifts via sublane
            # roll; sequence-edge / cross-batch leakage removed by precomputed
            # edge masks.  Rolls are done on an f32 copy (packed-sublane roll on
            # bf16 is not relied on); the single upcast is shared by both taps.
            h32 = h_bf.astype(f32)
            h_prev = (pltpu.roll(h32, 1, 0) * mprev_w).astype(bf16)      # h[l-1]
            h_next = (pltpu.roll(h32, R - 1, 0) * mnext_w).astype(bf16)  # h[l+1]
            y = jnp.dot(h_bf, wm_ref[...], preferred_element_type=f32)
            y = y + jnp.dot(h_prev, wp_ref[...], preferred_element_type=f32)
            y = y + jnp.dot(h_next, wn_ref[...], preferred_element_type=f32)
            return y

        # ---- initial conv (1 -> C0, k=7, stride=2, pad=3) as im2col matmul ----
        # (conv bias omitted: it cancels exactly in training-mode BN)
        y0 = jnp.dot(x_ref[...], w1_ref[...], preferred_element_type=f32)
        h = bn_relu(y0, g1_ref, be1_ref)

        # ---- TCN residual blocks (h / identity carried in bf16) ----
        for i in range(n_blocks):
            (wpa, wma, wna, ga, bea,
             wpb, wmb, wnb, gb, beb) = blk_refs[10 * i:10 * i + 10]
            identity = h
            h = bn_relu(conv3(h, wpa, wma, wna), ga, bea)
            # TODO(synk): nn.Dropout is implemented as identity (inference-mode,
            # deterministic forward); train-mode random masking is not emitted.
            h = bn_relu(conv3(h, wpb, wmb, wnb), gb, beb)
            h = jnp.maximum(h + identity, 0.0)          # bf16 residual add + ReLU

        # ---- adaptive_avg_pool1d(., 1) via reshape + sublane reduce ----
        # (padding rows must be masked out before the sum - see bn_relu invariant)
        hp = h.astype(f32) * mv_w
        pooled = jnp.sum(hp.reshape(B, L1p, Hp), axis=1) * inv_L1        # (B, Hp)
        out = jnp.dot(pooled.astype(bf16), wl_ref[...], preferred_element_type=f32)
        o_ref[...] = (out + bl_ref[...]).astype(o_ref.dtype)

    return kernel


def tcn_forward(x, params):
    """x: (B, input_size) float32 -> (B, output_size)."""
    B, L = x.shape
    w1 = params["w1"]
    C0 = w1.shape[0]
    blocks = params["blocks"]
    n_blocks = len(blocks)
    O, C_last = params["wl"].shape

    # TODO(synk): the PyTorch channel-mismatch residual branch creates a fresh
    # randomly-initialized nn.Conv1d inside forward(); there is no deterministic
    # Pallas equivalent, so all blocks must keep a constant channel width.
    for blk in blocks:
        assert blk["wa"].shape[0] == C0 and blk["wa"].shape[1] == C0
        assert blk["wb"].shape[0] == C0 and blk["wb"].shape[1] == C0
    assert C_last == C0

    K1, S1, P1 = 7, 2, 3
    L1 = (L + 2 * P1 - K1) // S1 + 1
    L1p = _round_up(L1, 8)          # per-batch padded sequence (sublane aligned)
    R = B * L1p                     # total rows (batch-major)
    Hp = _round_up(C0, 128)         # channels (lane-aligned)
    Op = _round_up(O, 128)          # lane-dense output

    f32, bf16 = jnp.float32, jnp.bfloat16

    # ---- conv1 im2col in the wrapper (in-channels = 1), padded 7->8 taps ----
    xp = jnp.pad(x.astype(f32), ((0, 0), (P1, P1)))
    idx = S1 * jnp.arange(L1)[:, None] + jnp.arange(K1)[None, :]   # (L1, 7)
    x_taps = xp[:, idx]                                            # (B, L1, 7)
    x_taps = jnp.pad(x_taps, ((0, 0), (0, L1p - L1), (0, 8 - K1)))
    x_taps = x_taps.reshape(R, 8).astype(bf16)

    def pad_vec(v):                                   # (C,) -> (1, Hp) f32
        return jnp.pad(v.astype(f32), (0, Hp - v.shape[0])).reshape(1, Hp)

    # initial conv weight (C0, 1, 7) -> (8, Hp) bf16
    w1f = jnp.transpose(w1[:, 0, :], (1, 0))
    w1f = jnp.pad(w1f.astype(f32), ((0, 8 - K1), (0, Hp - C0))).astype(bf16)

    def tap_weights(w):       # (Cout, Cin, 3) -> [w_prev, w_mid, w_next], (Hp,Hp) bf16
        Cout, Cin, _ = w.shape
        outs = []
        for k in range(3):    # tap k pairs with x[l + k - 1]
            wk = jnp.transpose(w[:, :, k], (1, 0)).astype(f32)     # (Cin, Cout)
            wk = jnp.pad(wk, ((0, Hp - Cin), (0, Hp - Cout)))
            outs.append(wk.astype(bf16))
        return outs

    inputs = [x_taps, w1f, pad_vec(params["g1"]), pad_vec(params["be1"])]
    for blk in blocks:
        inputs += tap_weights(blk["wa"]) + [pad_vec(blk["ga"]), pad_vec(blk["bea"])]
        inputs += tap_weights(blk["wb"]) + [pad_vec(blk["gb"]), pad_vec(blk["beb"])]

    wlf = jnp.pad(jnp.transpose(params["wl"], (1, 0)).astype(f32),
                  ((0, Hp - C_last), (0, Op - O))).astype(bf16)
    blf = jnp.pad(params["bl"].astype(f32), (0, Op - O)).reshape(1, Op)

    # static edge / validity masks (computed host-side, passed as (R,1) f32)
    l = np.arange(R) % L1p
    valid = l < L1
    m_prev = jnp.asarray(((l != 0) & valid).astype(np.float32).reshape(R, 1))
    m_next = jnp.asarray(((l != L1 - 1) & valid).astype(np.float32).reshape(R, 1))
    m_valid = jnp.asarray(valid.astype(np.float32).reshape(R, 1))

    inputs += [wlf, blf, m_prev, m_next, m_valid]

    kernel = _make_tcn_kernel(n_blocks, B, L1p, R, Hp,
                              1.0 / float(B * L1), 1.0 / float(L1))
    vspec = pl.BlockSpec(memory_space=pltpu.MemorySpace.VMEM)

    # Single invocation (no grid): everything VMEM-resident once, no redundant
    # double-buffering.  Adequate for small B*L1*H; see file-top NOTE for the
    # row-tiled grid plan at larger shapes / v7x.
    out = pl.pallas_call(
        kernel,
        out_shape=jax.ShapeDtypeStruct((B, Op), f32),
        in_specs=[vspec] * len(inputs),
        out_specs=vspec,
        compiler_params=pltpu.CompilerParams(vmem_limit_bytes=_vmem_limit_bytes()),
    )(*inputs)
    return out[:, :O]


def init_params(key, input_size, output_size, num_channels):
    C0 = num_channels[0]
    O = output_size
    keys = iter(jax.random.split(key, 6 + 8 * len(num_channels)))
    n = lambda shape, s: s * jax.random.normal(next(keys), shape, jnp.float32)
    params = dict(
        w1=n((C0, 1, 7), 0.3), b1=n((C0,), 0.1),
        g1=1.0 + n((C0,), 0.1), be1=n((C0,), 0.05),
        wl=n((O, num_channels[-1]), 0.2), bl=n((O,), 0.1),
        blocks=[],
    )
    for i in range(len(num_channels)):
        cin = num_channels[i - 1] if i > 0 else num_channels[0]
        cout = num_channels[i]
        params["blocks"].append(dict(
            wa=n((cout, cin, 3), 0.1), ba=n((cout,), 0.1),
            ga=1.0 + n((cout,), 0.1), bea=n((cout,), 0.05),
            wb=n((cout, cout, 3), 0.1), bb=n((cout,), 0.1),
            gb=1.0 + n((cout,), 0.1), beb=n((cout,), 0.05),
        ))
    return params


def reference_forward(x, params):
    # Pure-JAX reference mirroring the PyTorch forward (NCW layout), f32,
    # training-mode BN, dropout = identity.  Includes the conv biases that the
    # kernel intentionally drops (they cancel exactly in training-mode BN).
    xc = x.astype(jnp.float32)[:, None, :]

    def conv1d(h, w, b, stride, pad):
        out = lax.conv_general_dilated(
            h, w, window_strides=(stride,), padding=((pad, pad),),
            dimension_numbers=("NCH", "OIH", "NCH"))
        return out + b[None, :, None]

    def bn(h, g, be):
        m = jnp.mean(h, axis=(0, 2), keepdims=True)
        v = jnp.mean((h - m) ** 2, axis=(0, 2), keepdims=True)
        return (h - m) * lax.rsqrt(v + EPS) * g[None, :, None] + be[None, :, None]

    h = jax.nn.relu(bn(conv1d(xc, params["w1"], params["b1"], 2, 3),
                       params["g1"], params["be1"]))
    for blk in params["blocks"]:
        identity = h
        h = jax.nn.relu(bn(conv1d(h, blk["wa"], blk["ba"], 1, 1), blk["ga"], blk["bea"]))
        h = jax.nn.relu(bn(conv1d(h, blk["wb"], blk["bb"], 1, 1), blk["gb"], blk["beb"]))
        h = jax.nn.relu(h + identity)
    pooled = jnp.mean(h, axis=2)
    return pooled @ params["wl"].T + params["bl"][None, :]


if __name__ == "__main__":
    B, INPUT_SIZE, OUTPUT_SIZE = 2, 16, 8
    NUM_CHANNELS = [32, 32]

    key = jax.random.PRNGKey(0)
    kx, kp = jax.random.split(key)
    x = jax.random.normal(kx, (B, INPUT_SIZE), jnp.float32)
    params = init_params(kp, INPUT_SIZE, OUTPUT_SIZE, NUM_CHANNELS)

    out = tcn_forward(x, params)
    out = jax.block_until_ready(out)

    ref = reference_forward(x, params)
    # tolerance accommodates bf16 MXU inputs / bf16 activation carry
    np.testing.assert_allclose(np.asarray(out), np.asarray(ref), rtol=5e-2, atol=5e-2)
    print("KERNEL_OK")
</pallas_src>

<mosaic_0001>
module attributes {stable_mosaic.version = 11 : i64} {
  func.func @kernel(%arg0: memref<16x8xbf16, #tpu.memory_space<vmem>>, %arg1: memref<8x128xbf16, #tpu.memory_space<vmem>>, %arg2: memref<1x128xf32, #tpu.memory_space<vmem>>, %arg3: memref<1x128xf32, #tpu.memory_space<vmem>>, %arg4: memref<128x128xbf16, #tpu.memory_space<vmem>>, %arg5: memref<128x128xbf16, #tpu.memory_space<vmem>>, %arg6: memref<128x128xbf16, #tpu.memory_space<vmem>>, %arg7: memref<1x128xf32, #tpu.memory_space<vmem>>, %arg8: memref<1x128xf32, #tpu.memory_space<vmem>>, %arg9: memref<128x128xbf16, #tpu.memory_space<vmem>>, %arg10: memref<128x128xbf16, #tpu.memory_space<vmem>>, %arg11: memref<128x128xbf16, #tpu.memory_space<vmem>>, %arg12: memref<1x128xf32, #tpu.memory_space<vmem>>, %arg13: memref<1x128xf32, #tpu.memory_space<vmem>>, %arg14: memref<128x128xbf16, #tpu.memory_space<vmem>>, %arg15: memref<128x128xbf16, #tpu.memory_space<vmem>>, %arg16: memref<128x128xbf16, #tpu.memory_space<vmem>>, %arg17: memref<1x128xf32, #tpu.memory_space<vmem>>, %arg18: memref<1x128xf32, #tpu.memory_space<vmem>>, %arg19: memref<128x128xbf16, #tpu.memory_space<vmem>>, %arg20: memref<128x128xbf16, #tpu.memory_space<vmem>>, %arg21: memref<128x128xbf16, #tpu.memory_space<vmem>>, %arg22: memref<1x128xf32, #tpu.memory_space<vmem>>, %arg23: memref<1x128xf32, #tpu.memory_space<vmem>>, %arg24: memref<128x128xbf16, #tpu.memory_space<vmem>>, %arg25: memref<1x128xf32, #tpu.memory_space<vmem>>, %arg26: memref<16x1xf32, #tpu.memory_space<vmem>>, %arg27: memref<16x1xf32, #tpu.memory_space<vmem>>, %arg28: memref<16x1xf32, #tpu.memory_space<vmem>>, %arg29: memref<2x128xf32, #tpu.memory_space<vmem>>) attributes {dimension_semantics = [], scalar_prefetch = 0 : i64, scratch_operands = 0 : i64, tpu.core_type = #tpu.core_type<tc>} {
    %c0 = arith.constant 0 : index
    %c0_0 = arith.constant 0 : index
    %0 = vector.load %arg26[%c0, %c0_0] : memref<16x1xf32, #tpu.memory_space<vmem>>, vector<16x1xf32>
    %1 = vector.shape_cast %0 : vector<16x1xf32> to vector<16x1xf32>
    %2 = vector.broadcast %1 : vector<16x1xf32> to vector<16x128xf32>
    %c0_1 = arith.constant 0 : index
    %c0_2 = arith.constant 0 : index
    %3 = vector.load %arg27[%c0_1, %c0_2] : memref<16x1xf32, #tpu.memory_space<vmem>>, vector<16x1xf32>
    %4 = vector.shape_cast %3 : vector<16x1xf32> to vector<16x1xf32>
    %5 = vector.broadcast %4 : vector<16x1xf32> to vector<16x128xf32>
    %c0_3 = arith.constant 0 : index
    %c0_4 = arith.constant 0 : index
    %6 = vector.load %arg28[%c0_3, %c0_4] : memref<16x1xf32, #tpu.memory_space<vmem>>, vector<16x1xf32>
    %7 = vector.shape_cast %6 : vector<16x1xf32> to vector<16x1xf32>
    %8 = vector.broadcast %7 : vector<16x1xf32> to vector<16x128xf32>
    %c0_5 = arith.constant 0 : index
    %c0_6 = arith.constant 0 : index
    %9 = vector.load %arg0[%c0_5, %c0_6] : memref<16x8xbf16, #tpu.memory_space<vmem>>, vector<16x8xbf16>
    %c0_7 = arith.constant 0 : index
    %c0_8 = arith.constant 0 : index
    %10 = vector.load %arg1[%c0_7, %c0_8] : memref<8x128xbf16, #tpu.memory_space<vmem>>, vector<8x128xbf16>
    %cst = arith.constant dense<0.000000e+00> : vector<16x128xf32>
    %11 = tpu.matmul %9, %10, %cst {dimension_numbers = #tpu.dot_dimension_numbers<[1], [0], [0], [1], [0, 0, 1, 1], [], []>} : vector<16x8xbf16>, vector<8x128xbf16>, vector<16x128xf32> -> vector<16x128xf32>
    %12 = vector.extract_strided_slice %11 {offsets = [0, 0], sizes = [1, 128], strides = [1, 1]} : vector<16x128xf32> to vector<1x128xf32>
    %13 = vector.broadcast %12 : vector<1x128xf32> to vector<16x128xf32>
    %14 = arith.subf %11, %13 : vector<16x128xf32>
    %15 = arith.mulf %14, %8 : vector<16x128xf32>
    %cst_9 = arith.constant dense<0.000000e+00> : vector<128xf32>
    %16 = vector.multi_reduction <add>, %15, %cst_9 [0] : vector<16x128xf32> to vector<128xf32>
    %17 = vector.shape_cast %16 : vector<128xf32> to vector<1x128xf32>
    %18 = arith.mulf %15, %15 : vector<16x128xf32>
    %cst_10 = arith.constant dense<0.000000e+00> : vector<128xf32>
    %19 = vector.multi_reduction <add>, %18, %cst_10 [0] : vector<16x128xf32> to vector<128xf32>
    %20 = vector.shape_cast %19 : vector<128xf32> to vector<1x128xf32>
    %cst_11 = arith.constant 6.250000e-02 : f32
    %21 = vector.broadcast %cst_11 : f32 to vector<1x128xf32>
    %22 = arith.mulf %17, %21 : vector<1x128xf32>
    %cst_12 = arith.constant 6.250000e-02 : f32
    %23 = vector.broadcast %cst_12 : f32 to vector<1x128xf32>
    %24 = arith.mulf %20, %23 : vector<1x128xf32>
    %25 = arith.mulf %22, %22 : vector<1x128xf32>
    %26 = arith.subf %24, %25 : vector<1x128xf32>
    %c0_13 = arith.constant 0 : index
    %c0_14 = arith.constant 0 : index
    %27 = vector.load %arg2[%c0_13, %c0_14] : memref<1x128xf32, #tpu.memory_space<vmem>>, vector<1x128xf32>
    %cst_15 = arith.constant 9.99999974E-6 : f32
    %28 = vector.broadcast %cst_15 : f32 to vector<1x128xf32>
    %29 = arith.addf %26, %28 : vector<1x128xf32>
    %30 = math.rsqrt %29 : vector<1x128xf32>
    %31 = arith.mulf %27, %30 : vector<1x128xf32>
    %c0_16 = arith.constant 0 : index
    %c0_17 = arith.constant 0 : index
    %32 = vector.load %arg3[%c0_16, %c0_17] : memref<1x128xf32, #tpu.memory_space<vmem>>, vector<1x128xf32>
    %33 = arith.addf %22, %12 : vector<1x128xf32>
    %34 = arith.mulf %33, %31 : vector<1x128xf32>
    %35 = arith.subf %32, %34 : vector<1x128xf32>
    %36 = vector.broadcast %31 : vector<1x128xf32> to vector<16x128xf32>
    %37 = arith.mulf %11, %36 : vector<16x128xf32>
    %38 = vector.broadcast %35 : vector<1x128xf32> to vector<16x128xf32>
    %39 = arith.addf %37, %38 : vector<16x128xf32>
    %cst_18 = arith.constant 0.000000e+00 : f32
    %40 = vector.broadcast %cst_18 : f32 to vector<16x128xf32>
    %41 = arith.maximumf %39, %40 : vector<16x128xf32>
    %42 = arith.truncf %41 : vector<16x128xf32> to vector<16x128xbf16>
    %43 = arith.extf %42 : vector<16x128xbf16> to vector<16x128xf32>
    %c1_i32 = arith.constant 1 : i32
    %44 = tpu.dynamic_rotate %43 by %c1_i32 dim 0 : vector<16x128xf32>, i32 -> vector<16x128xf32>
    %45 = arith.mulf %44, %2 : vector<16x128xf32>
    %46 = arith.truncf %45 : vector<16x128xf32> to vector<16x128xbf16>
    %c15_i32 = arith.constant 15 : i32
    %47 = tpu.dynamic_rotate %43 by %c15_i32 dim 0 : vector<16x128xf32>, i32 -> vector<16x128xf32>
    %48 = arith.mulf %47, %5 : vector<16x128xf32>
    %49 = arith.truncf %48 : vector<16x128xf32> to vector<16x128xbf16>
    %c0_19 = arith.constant 0 : index
    %c0_20 = arith.constant 0 : index
    %50 = vector.load %arg5[%c0_19, %c0_20] : memref<128x128xbf16, #tpu.memory_space<vmem>>, vector<128x128xbf16>
    %cst_21 = arith.constant dense<0.000000e+00> : vector<16x128xf32>
    %51 = tpu.matmul %42, %50, %cst_21 {dimension_numbers = #tpu.dot_dimension_numbers<[1], [0], [0], [1], [0, 0, 1, 1], [], []>} : vector<16x128xbf16>, vector<128x128xbf16>, vector<16x128xf32> -> vector<16x128xf32>
    %c0_22 = arith.constant 0 : index
    %c0_23 = arith.constant 0 : index
    %52 = vector.load %arg4[%c0_22, %c0_23] : memref<128x128xbf16, #tpu.memory_space<vmem>>, vector<128x128xbf16>
    %cst_24 = arith.constant dense<0.000000e+00> : vector<16x128xf32>
    %53 = tpu.matmul %46, %52, %cst_24 {dimension_numbers = #tpu.dot_dimension_numbers<[1], [0], [0], [1], [0, 0, 1, 1], [], []>} : vector<16x128xbf16>, vector<128x128xbf16>, vector<16x128xf32> -> vector<16x128xf32>
    %54 = arith.addf %51, %53 : vector<16x128xf32>
    %c0_25 = arith.constant 0 : index
    %c0_26 = arith.constant 0 : index
    %55 = vector.load %arg6[%c0_25, %c0_26] : memref<128x128xbf16, #tpu.memory_space<vmem>>, vector<128x128xbf16>
    %cst_27 = arith.constant dense<0.000000e+00> : vector<16x128xf32>
    %56 = tpu.matmul %49, %55, %cst_27 {dimension_numbers = #tpu.dot_dimension_numbers<[1], [0], [0], [1], [0, 0, 1, 1], [], []>} : vector<16x128xbf16>, vector<128x128xbf16>, vector<16x128xf32> -> vector<16x128xf32>
    %57 = arith.addf %54, %56 : vector<16x128xf32>
    %58 = vector.extract_strided_slice %57 {offsets = [0, 0], sizes = [1, 128], strides = [1, 1]} : vector<16x128xf32> to vector<1x128xf32>
    %59 = vector.broadcast %58 : vector<1x128xf32> to vector<16x128xf32>
    %60 = arith.subf %57, %59 : vector<16x128xf32>
    %61 = arith.mulf %60, %8 : vector<16x128xf32>
    %cst_28 = arith.constant dense<0.000000e+00> : vector<128xf32>
    %62 = vector.multi_reduction <add>, %61, %cst_28 [0] : vector<16x128xf32> to vector<128xf32>
    %63 = vector.shape_cast %62 : vector<128xf32> to vector<1x128xf32>
    %64 = arith.mulf %61, %61 : vector<16x128xf32>
    %cst_29 = arith.constant dense<0.000000e+00> : vector<128xf32>
    %65 = vector.multi_reduction <add>, %64, %cst_29 [0] : vector<16x128xf32> to vector<128xf32>
    %66 = vector.shape_cast %65 : vector<128xf32> to vector<1x128xf32>
    %cst_30 = arith.constant 6.250000e-02 : f32
    %67 = vector.broadcast %cst_30 : f32 to vector<1x128xf32>
    %68 = arith.mulf %63, %67 : vector<1x128xf32>
    %cst_31 = arith.constant 6.250000e-02 : f32
    %69 = vector.broadcast %cst_31 : f32 to vector<1x128xf32>
    %70 = arith.mulf %66, %69 : vector<1x128xf32>
    %71 = arith.mulf %68, %68 : vector<1x128xf32>
    %72 = arith.subf %70, %71 : vector<1x128xf32>
    %c0_32 = arith.constant 0 : index
    %c0_33 = arith.constant 0 : index
    %73 = vector.load %arg7[%c0_32, %c0_33] : memref<1x128xf32, #tpu.memory_space<vmem>>, vector<1x128xf32>
    %cst_34 = arith.constant 9.99999974E-6 : f32
    %74 = vector.broadcast %cst_34 : f32 to vector<1x128xf32>
    %75 = arith.addf %72, %74 : vector<1x128xf32>
    %76 = math.rsqrt %75 : vector<1x128xf32>
    %77 = arith.mulf %73, %76 : vector<1x128xf32>
    %c0_35 = arith.constant 0 : index
    %c0_36 = arith.constant 0 : index
    %78 = vector.load %arg8[%c0_35, %c0_36] : memref<1x128xf32, #tpu.memory_space<vmem>>, vector<1x128xf32>
    %79 = arith.addf %68, %58 : vector<1x128xf32>
    %80 = arith.mulf %79, %77 : vector<1x128xf32>
    %81 = arith.subf %78, %80 : vector<1x128xf32>
    %82 = vector.broadcast %77 : vector<1x128xf32> to vector<16x128xf32>
    %83 = arith.mulf %57, %82 : vector<16x128xf32>
    %84 = vector.broadcast %81 : vector<1x128xf32> to vector<16x128xf32>
    %85 = arith.addf %83, %84 : vector<16x128xf32>
    %cst_37 = arith.constant 0.000000e+00 : f32
    %86 = vector.broadcast %cst_37 : f32 to vector<16x128xf32>
    %87 = arith.maximumf %85, %86 : vector<16x128xf32>
    %88 = arith.truncf %87 : vector<16x128xf32> to vector<16x128xbf16>
    %89 = arith.extf %88 : vector<16x128xbf16> to vector<16x128xf32>
    %c1_i32_38 = arith.constant 1 : i32
    %90 = tpu.dynamic_rotate %89 by %c1_i32_38 dim 0 : vector<16x128xf32>, i32 -> vector<16x128xf32>
    %91 = arith.mulf %90, %2 : vector<16x128xf32>
    %92 = arith.truncf %91 : vector<16x128xf32> to vector<16x128xbf16>
    %c15_i32_39 = arith.constant 15 : i32
    %93 = tpu.dynamic_rotate %89 by %c15_i32_39 dim 0 : vector<16x128xf32>, i32 -> vector<16x128xf32>
    %94 = arith.mulf %93, %5 : vector<16x128xf32>
    %95 = arith.truncf %94 : vector<16x128xf32> to vector<16x128xbf16>
    %c0_40 = arith.constant 0 : index
    %c0_41 = arith.constant 0 : index
    %96 = vector.load %arg10[%c0_40, %c0_41] : memref<128x128xbf16, #tpu.memory_space<vmem>>, vector<128x128xbf16>
    %cst_42 = arith.constant dense<0.000000e+00> : vector<16x128xf32>
    %97 = tpu.matmul %88, %96, %cst_42 {dimension_numbers = #tpu.dot_dimension_numbers<[1], [0], [0], [1], [0, 0, 1, 1], [], []>} : vector<16x128xbf16>, vector<128x128xbf16>, vector<16x128xf32> -> vector<16x128xf32>
    %c0_43 = arith.constant 0 : index
    %c0_44 = arith.constant 0 : index
    %98 = vector.load %arg9[%c0_43, %c0_44] : memref<128x128xbf16, #tpu.memory_space<vmem>>, vector<128x128xbf16>
    %cst_45 = arith.constant dense<0.000000e+00> : vector<16x128xf32>
    %99 = tpu.matmul %92, %98, %cst_45 {dimension_numbers = #tpu.dot_dimension_numbers<[1], [0], [0], [1], [0, 0, 1, 1], [], []>} : vector<16x128xbf16>, vector<128x128xbf16>, vector<16x128xf32> -> vector<16x128xf32>
    %100 = arith.addf %97, %99 : vector<16x128xf32>
    %c0_46 = arith.constant 0 : index
    %c0_47 = arith.constant 0 : index
    %101 = vector.load %arg11[%c0_46, %c0_47] : memref<128x128xbf16, #tpu.memory_space<vmem>>, vector<128x128xbf16>
    %cst_48 = arith.constant dense<0.000000e+00> : vector<16x128xf32>
    %102 = tpu.matmul %95, %101, %cst_48 {dimension_numbers = #tpu.dot_dimension_numbers<[1], [0], [0], [1], [0, 0, 1, 1], [], []>} : vector<16x128xbf16>, vector<128x128xbf16>, vector<16x128xf32> -> vector<16x128xf32>
    %103 = arith.addf %100, %102 : vector<16x128xf32>
    %104 = vector.extract_strided_slice %103 {offsets = [0, 0], sizes = [1, 128], strides = [1, 1]} : vector<16x128xf32> to vector<1x128xf32>
    %105 = vector.broadcast %104 : vector<1x128xf32> to vector<16x128xf32>
    %106 = arith.subf %103, %105 : vector<16x128xf32>
    %107 = arith.mulf %106, %8 : vector<16x128xf32>
    %cst_49 = arith.constant dense<0.000000e+00> : vector<128xf32>
    %108 = vector.multi_reduction <add>, %107, %cst_49 [0] : vector<16x128xf32> to vector<128xf32>
    %109 = vector.shape_cast %108 : vector<128xf32> to vector<1x128xf32>
    %110 = arith.mulf %107, %107 : vector<16x128xf32>
    %cst_50 = arith.constant dense<0.000000e+00> : vector<128xf32>
    %111 = vector.multi_reduction <add>, %110, %cst_50 [0] : vector<16x128xf32> to vector<128xf32>
    %112 = vector.shape_cast %111 : vector<128xf32> to vector<1x128xf32>
    %cst_51 = arith.constant 6.250000e-02 : f32
    %113 = vector.broadcast %cst_51 : f32 to vector<1x128xf32>
    %114 = arith.mulf %109, %113 : vector<1x128xf32>
    %cst_52 = arith.constant 6.250000e-02 : f32
    %115 = vector.broadcast %cst_52 : f32 to vector<1x128xf32>
    %116 = arith.mulf %112, %115 : vector<1x128xf32>
    %117 = arith.mulf %114, %114 : vector<1x128xf32>
    %118 = arith.subf %116, %117 : vector<1x128xf32>
    %c0_53 = arith.constant 0 : index
    %c0_54 = arith.constant 0 : index
    %119 = vector.load %arg12[%c0_53, %c0_54] : memref<1x128xf32, #tpu.memory_space<vmem>>, vector<1x128xf32>
    %cst_55 = arith.constant 9.99999974E-6 : f32
    %120 = vector.broadcast %cst_55 : f32 to vector<1x128xf32>
    %121 = arith.addf %118, %120 : vector<1x128xf32>
    %122 = math.rsqrt %121 : vector<1x128xf32>
    %123 = arith.mulf %119, %122 : vector<1x128xf32>
    %c0_56 = arith.constant 0 : index
    %c0_57 = arith.constant 0 : index
    %124 = vector.load %arg13[%c0_56, %c0_57] : memref<1x128xf32, #tpu.memory_space<vmem>>, vector<1x128xf32>
    %125 = arith.addf %114, %104 : vector<1x128xf32>
    %126 = arith.mulf %125, %123 : vector<1x128xf32>
    %127 = arith.subf %124, %126 : vector<1x128xf32>
    %128 = vector.broadcast %123 : vector<1x128xf32> to vector<16x128xf32>
    %129 = arith.mulf %103, %128 : vector<16x128xf32>
    %130 = vector.broadcast %127 : vector<1x128xf32> to vector<16x128xf32>
    %131 = arith.addf %129, %130 : vector<16x128xf32>
    %cst_58 = arith.constant 0.000000e+00 : f32
    %132 = vector.broadcast %cst_58 : f32 to vector<16x128xf32>
    %133 = arith.maximumf %131, %132 : vector<16x128xf32>
    %134 = arith.truncf %133 : vector<16x128xf32> to vector<16x128xbf16>
    %135 = arith.addf %134, %42 : vector<16x128xbf16>
    %cst_59 = arith.constant 0.000000e+00 : bf16
    %136 = vector.broadcast %cst_59 : bf16 to vector<16x128xbf16>
    %137 = arith.maximumf %135, %136 : vector<16x128xbf16>
    %138 = arith.extf %137 : vector<16x128xbf16> to vector<16x128xf32>
    %c1_i32_60 = arith.constant 1 : i32
    %139 = tpu.dynamic_rotate %138 by %c1_i32_60 dim 0 : vector<16x128xf32>, i32 -> vector<16x128xf32>
    %140 = arith.mulf %139, %2 : vector<16x128xf32>
    %141 = arith.truncf %140 : vector<16x128xf32> to vector<16x128xbf16>
    %c15_i32_61 = arith.constant 15 : i32
    %142 = tpu.dynamic_rotate %138 by %c15_i32_61 dim 0 : vector<16x128xf32>, i32 -> vector<16x128xf32>
    %143 = arith.mulf %142, %5 : vector<16x128xf32>
    %144 = arith.truncf %143 : vector<16x128xf32> to vector<16x128xbf16>
    %c0_62 = arith.constant 0 : index
    %c0_63 = arith.constant 0 : index
    %145 = vector.load %arg15[%c0_62, %c0_63] : memref<128x128xbf16, #tpu.memory_space<vmem>>, vector<128x128xbf16>
    %cst_64 = arith.constant dense<0.000000e+00> : vector<16x128xf32>
    %146 = tpu.matmul %137, %145, %cst_64 {dimension_numbers = #tpu.dot_dimension_numbers<[1], [0], [0], [1], [0, 0, 1, 1], [], []>} : vector<16x128xbf16>, vector<128x128xbf16>, vector<16x128xf32> -> vector<16x128xf32>
    %c0_65 = arith.constant 0 : index
    %c0_66 = arith.constant 0 : index
    %147 = vector.load %arg14[%c0_65, %c0_66] : memref<128x128xbf16, #tpu.memory_space<vmem>>, vector<128x128xbf16>
    %cst_67 = arith.constant dense<0.000000e+00> : vector<16x128xf32>
    %148 = tpu.matmul %141, %147, %cst_67 {dimension_numbers = #tpu.dot_dimension_numbers<[1], [0], [0], [1], [0, 0, 1, 1], [], []>} : vector<16x128xbf16>, vector<128x128xbf16>, vector<16x128xf32> -> vector<16x128xf32>
    %149 = arith.addf %146, %148 : vector<16x128xf32>
    %c0_68 = arith.constant 0 : index
    %c0_69 = arith.constant 0 : index
    %150 = vector.load %arg16[%c0_68, %c0_69] : memref<128x128xbf16, #tpu.memory_space<vmem>>, vector<128x128xbf16>
    %cst_70 = arith.constant dense<0.000000e+00> : vector<16x128xf32>
    %151 = tpu.matmul %144, %150, %cst_70 {dimension_numbers = #tpu.dot_dimension_numbers<[1], [0], [0], [1], [0, 0, 1, 1], [], []>} : vector<16x128xbf16>, vector<128x128xbf16>, vector<16x128xf32> -> vector<16x128xf32>
    %152 = arith.addf %149, %151 : vector<16x128xf32>
    %153 = vector.extract_strided_slice %152 {offsets = [0, 0], sizes = [1, 128], strides = [1, 1]} : vector<16x128xf32> to vector<1x128xf32>
    %154 = vector.broadcast %153 : vector<1x128xf32> to vector<16x128xf32>
    %155 = arith.subf %152, %154 : vector<16x128xf32>
    %156 = arith.mulf %155, %8 : vector<16x128xf32>
    %cst_71 = arith.constant dense<0.000000e+00> : vector<128xf32>
    %157 = vector.multi_reduction <add>, %156, %cst_71 [0] : vector<16x128xf32> to vector<128xf32>
    %158 = vector.shape_cast %157 : vector<128xf32> to vector<1x128xf32>
    %159 = arith.mulf %156, %156 : vector<16x128xf32>
    %cst_72 = arith.constant dense<0.000000e+00> : vector<128xf32>
    %160 = vector.multi_reduction <add>, %159, %cst_72 [0] : vector<16x128xf32> to vector<128xf32>
    %161 = vector.shape_cast %160 : vector<128xf32> to vector<1x128xf32>
    %cst_73 = arith.constant 6.250000e-02 : f32
    %162 = vector.broadcast %cst_73 : f32 to vector<1x128xf32>
    %163 = arith.mulf %158, %162 : vector<1x128xf32>
    %cst_74 = arith.constant 6.250000e-02 : f32
    %164 = vector.broadcast %cst_74 : f32 to vector<1x128xf32>
    %165 = arith.mulf %161, %164 : vector<1x128xf32>
    %166 = arith.mulf %163, %163 : vector<1x128xf32>
    %167 = arith.subf %165, %166 : vector<1x128xf32>
    %c0_75 = arith.constant 0 : index
    %c0_76 = arith.constant 0 : index
    %168 = vector.load %arg17[%c0_75, %c0_76] : memref<1x128xf32, #tpu.memory_space<vmem>>, vector<1x128xf32>
    %cst_77 = arith.constant 9.99999974E-6 : f32
    %169 = vector.broadcast %cst_77 : f32 to vector<1x128xf32>
    %170 = arith.addf %167, %169 : vector<1x128xf32>
    %171 = math.rsqrt %170 : vector<1x128xf32>
    %172 = arith.mulf %168, %171 : vector<1x128xf32>
    %c0_78 = arith.constant 0 : index
    %c0_79 = arith.constant 0 : index
    %173 = vector.load %arg18[%c0_78, %c0_79] : memref<1x128xf32, #tpu.memory_space<vmem>>, vector<1x128xf32>
    %174 = arith.addf %163, %153 : vector<1x128xf32>
    %175 = arith.mulf %174, %172 : vector<1x128xf32>
    %176 = arith.subf %173, %175 : vector<1x128xf32>
    %177 = vector.broadcast %172 : vector<1x128xf32> to vector<16x128xf32>
    %178 = arith.mulf %152, %177 : vector<16x128xf32>
    %179 = vector.broadcast %176 : vector<1x128xf32> to vector<16x128xf32>
    %180 = arith.addf %178, %179 : vector<16x128xf32>
    %cst_80 = arith.constant 0.000000e+00 : f32
    %181 = vector.broadcast %cst_80 : f32 to vector<16x128xf32>
    %182 = arith.maximumf %180, %181 : vector<16x128xf32>
    %183 = arith.truncf %182 : vector<16x128xf32> to vector<16x128xbf16>
    %184 = arith.extf %183 : vector<16x128xbf16> to vector<16x128xf32>
    %c1_i32_81 = arith.constant 1 : i32
    %185 = tpu.dynamic_rotate %184 by %c1_i32_81 dim 0 : vector<16x128xf32>, i32 -> vector<16x128xf32>
    %186 = arith.mulf %185, %2 : vector<16x128xf32>
    %187 = arith.truncf %186 : vector<16x128xf32> to vector<16x128xbf16>
    %c15_i32_82 = arith.constant 15 : i32
    %188 = tpu.dynamic_rotate %184 by %c15_i32_82 dim 0 : vector<16x128xf32>, i32 -> vector<16x128xf32>
    %189 = arith.mulf %188, %5 : vector<16x128xf32>
    %190 = arith.truncf %189 : vector<16x128xf32> to vector<16x128xbf16>
    %c0_83 = arith.constant 0 : index
    %c0_84 = arith.constant 0 : index
    %191 = vector.load %arg20[%c0_83, %c0_84] : memref<128x128xbf16, #tpu.memory_space<vmem>>, vector<128x128xbf16>
    %cst_85 = arith.constant dense<0.000000e+00> : vector<16x128xf32>
    %192 = tpu.matmul %183, %191, %cst_85 {dimension_numbers = #tpu.dot_dimension_numbers<[1], [0], [0], [1], [0, 0, 1, 1], [], []>} : vector<16x128xbf16>, vector<128x128xbf16>, vector<16x128xf32> -> vector<16x128xf32>
    %c0_86 = arith.constant 0 : index
    %c0_87 = arith.constant 0 : index
    %193 = vector.load %arg19[%c0_86, %c0_87] : memref<128x128xbf16, #tpu.memory_space<vmem>>, vector<128x128xbf16>
    %cst_88 = arith.constant dense<0.000000e+00> : vector<16x128xf32>
    %194 = tpu.matmul %187, %193, %cst_88 {dimension_numbers = #tpu.dot_dimension_numbers<[1], [0], [0], [1], [0, 0, 1, 1], [], []>} : vector<16x128xbf16>, vector<128x128xbf16>, vector<16x128xf32> -> vector<16x128xf32>
    %195 = arith.addf %192, %194 : vector<16x128xf32>
    %c0_89 = arith.constant 0 : index
    %c0_90 = arith.constant 0 : index
    %196 = vector.load %arg21[%c0_89, %c0_90] : memref<128x128xbf16, #tpu.memory_space<vmem>>, vector<128x128xbf16>
    %cst_91 = arith.constant dense<0.000000e+00> : vector<16x128xf32>
    %197 = tpu.matmul %190, %196, %cst_91 {dimension_numbers = #tpu.dot_dimension_numbers<[1], [0], [0], [1], [0, 0, 1, 1], [], []>} : vector<16x128xbf16>, vector<128x128xbf16>, vector<16x128xf32> -> vector<16x128xf32>
    %198 = arith.addf %195, %197 : vector<16x128xf32>
    %199 = vector.extract_strided_slice %198 {offsets = [0, 0], sizes = [1, 128], strides = [1, 1]} : vector<16x128xf32> to vector<1x128xf32>
    %200 = vector.broadcast %199 : vector<1x128xf32> to vector<16x128xf32>
    %201 = arith.subf %198, %200 : vector<16x128xf32>
    %202 = arith.mulf %201, %8 : vector<16x128xf32>
    %cst_92 = arith.constant dense<0.000000e+00> : vector<128xf32>
    %203 = vector.multi_reduction <add>, %202, %cst_92 [0] : vector<16x128xf32> to vector<128xf32>
    %204 = vector.shape_cast %203 : vector<128xf32> to vector<1x128xf32>
    %205 = arith.mulf %202, %202 : vector<16x128xf32>
    %cst_93 = arith.constant dense<0.000000e+00> : vector<128xf32>
    %206 = vector.multi_reduction <add>, %205, %cst_93 [0] : vector<16x128xf32> to vector<128xf32>
    %207 = vector.shape_cast %206 : vector<128xf32> to vector<1x128xf32>
    %cst_94 = arith.constant 6.250000e-02 : f32
    %208 = vector.broadcast %cst_94 : f32 to vector<1x128xf32>
    %209 = arith.mulf %204, %208 : vector<1x128xf32>
    %cst_95 = arith.constant 6.250000e-02 : f32
    %210 = vector.broadcast %cst_95 : f32 to vector<1x128xf32>
    %211 = arith.mulf %207, %210 : vector<1x128xf32>
    %212 = arith.mulf %209, %209 : vector<1x128xf32>
    %213 = arith.subf %211, %212 : vector<1x128xf32>
    %c0_96 = arith.constant 0 : index
    %c0_97 = arith.constant 0 : index
    %214 = vector.load %arg22[%c0_96, %c0_97] : memref<1x128xf32, #tpu.memory_space<vmem>>, vector<1x128xf32>
    %cst_98 = arith.constant 9.99999974E-6 : f32
    %215 = vector.broadcast %cst_98 : f32 to vector<1x128xf32>
    %216 = arith.addf %213, %215 : vector<1x128xf32>
    %217 = math.rsqrt %216 : vector<1x128xf32>
    %218 = arith.mulf %214, %217 : vector<1x128xf32>
    %c0_99 = arith.constant 0 : index
    %c0_100 = arith.constant 0 : index
    %219 = vector.load %arg23[%c0_99, %c0_100] : memref<1x128xf32, #tpu.memory_space<vmem>>, vector<1x128xf32>
    %220 = arith.addf %209, %199 : vector<1x128xf32>
    %221 = arith.mulf %220, %218 : vector<1x128xf32>
    %222 = arith.subf %219, %221 : vector<1x128xf32>
    %223 = vector.broadcast %218 : vector<1x128xf32> to vector<16x128xf32>
    %224 = arith.mulf %198, %223 : vector<16x128xf32>
    %225 = vector.broadcast %222 : vector<1x128xf32> to vector<16x128xf32>
    %226 = arith.addf %224, %225 : vector<16x128xf32>
    %cst_101 = arith.constant 0.000000e+00 : f32
    %227 = vector.broadcast %cst_101 : f32 to vector<16x128xf32>
    %228 = arith.maximumf %226, %227 : vector<16x128xf32>
    %229 = arith.truncf %228 : vector<16x128xf32> to vector<16x128xbf16>
    %230 = arith.addf %229, %137 : vector<16x128xbf16>
    %cst_102 = arith.constant 0.000000e+00 : bf16
    %231 = vector.broadcast %cst_102 : bf16 to vector<16x128xbf16>
    %232 = arith.maximumf %230, %231 : vector<16x128xbf16>
    %233 = arith.extf %232 : vector<16x128xbf16> to vector<16x128xf32>
    %234 = arith.mulf %233, %8 : vector<16x128xf32>
    %235 = vector.shape_cast %234 : vector<16x128xf32> to vector<2x8x128xf32>
    %cst_103 = arith.constant dense<0.000000e+00> : vector<2x128xf32>
    %236 = vector.multi_reduction <add>, %235, %cst_103 [1] : vector<2x8x128xf32> to vector<2x128xf32>
    %cst_104 = arith.constant 1.250000e-01 : f32
    %237 = vector.broadcast %cst_104 : f32 to vector<2x128xf32>
    %238 = arith.mulf %236, %237 : vector<2x128xf32>
    %239 = arith.truncf %238 : vector<2x128xf32> to vector<2x128xbf16>
    %c0_105 = arith.constant 0 : index
    %c0_106 = arith.constant 0 : index
    %240 = vector.load %arg24[%c0_105, %c0_106] : memref<128x128xbf16, #tpu.memory_space<vmem>>, vector<128x128xbf16>
    %cst_107 = arith.constant dense<0.000000e+00> : vector<2x128xf32>
    %241 = tpu.matmul %239, %240, %cst_107 {dimension_numbers = #tpu.dot_dimension_numbers<[1], [0], [0], [1], [0, 0, 1, 1], [], []>} : vector<2x128xbf16>, vector<128x128xbf16>, vector<2x128xf32> -> vector<2x128xf32>
    %c0_108 = arith.constant 0 : index
    %c0_109 = arith.constant 0 : index
    %242 = vector.load %arg25[%c0_108, %c0_109] : memref<1x128xf32, #tpu.memory_space<vmem>>, vector<1x128xf32>
    %243 = vector.broadcast %242 : vector<1x128xf32> to vector<2x128xf32>
    %244 = arith.addf %241, %243 : vector<2x128xf32>
    %c0_110 = arith.constant 0 : index
    %c0_111 = arith.constant 0 : index
    %245 = vector.load %arg29[%c0_110, %c0_111] : memref<2x128xf32, #tpu.memory_space<vmem>>, vector<2x128xf32>
    tpu.vector_store %arg29[%c0_110, %c0_111], %244 {strides = array<i32>} : memref<2x128xf32, #tpu.memory_space<vmem>>, vector<2x128xf32>,
    return
  }
}

</mosaic_0001>

<llo_original>
// kernel: tpu_custom_call.1
$region0: #{tpu_custom_call.1}
  #allocation0 [shape = 'u32[]', space=smem, size = 0x4, offset = 0x4, fixed_abs, tag = 'smem constant byte address 0x4 - core index']
  #allocation1 [shape = 'u32[144,128]{1,0:T(1,128)}', space=vmem, size = 0x12000, scoped, tag = 'internal scratch']
  %s0 = inlined_call_operand.smem [shape: u32[30], index: -1, kind: input, shape index: {}]
  %s1 = sld [smem:[%s0]]
  %s2 = scalar_lea.smem %s0, 1
  %s3 = sld [smem:[%s2]]
  %s4 = scalar_lea.smem %s0, 2
  %s5 = sld [smem:[%s4]]
  %s6 = scalar_lea.smem %s0, 3
  %s7 = sld [smem:[%s6]]
  %s8 = scalar_lea.smem %s0, 4
  %s9 = sld [smem:[%s8]]
  %s10 = scalar_lea.smem %s0, 5
  %s11 = sld [smem:[%s10]]
  %s12 = scalar_lea.smem %s0, 6
  %s13 = sld [smem:[%s12]]
  %s14 = scalar_lea.smem %s0, 7
  %s15 = sld [smem:[%s14]]
  %s16 = scalar_lea.smem %s0, 8
  %s17 = sld [smem:[%s16]]
  %s18 = scalar_lea.smem %s0, 9
  %s19 = sld [smem:[%s18]]
  %s20 = scalar_lea.smem %s0, 10
  %s21 = sld [smem:[%s20]]
  %s22 = scalar_lea.smem %s0, 11
  %s23 = sld [smem:[%s22]]
  %s24 = scalar_lea.smem %s0, 12
  %s25 = sld [smem:[%s24]]
  %s26 = scalar_lea.smem %s0, 13
  %s27 = sld [smem:[%s26]]
  %s28 = scalar_lea.smem %s0, 14
  %s29 = sld [smem:[%s28]]
  %s30 = scalar_lea.smem %s0, 15
  %s31 = sld [smem:[%s30]]
  %s32 = scalar_lea.smem %s0, 16
  %s33 = sld [smem:[%s32]]
  %s34 = scalar_lea.smem %s0, 17
  %s35 = sld [smem:[%s34]]
  %s36 = scalar_lea.smem %s0, 18
  %s37 = sld [smem:[%s36]]
  %s38 = scalar_lea.smem %s0, 19
  %s39 = sld [smem:[%s38]]
  %s40 = scalar_lea.smem %s0, 20
  %s41 = sld [smem:[%s40]]
  %s42 = scalar_lea.smem %s0, 21
  %s43 = sld [smem:[%s42]]
  %s44 = scalar_lea.smem %s0, 22
  %s45 = sld [smem:[%s44]]
  %s46 = scalar_lea.smem %s0, 23
  %s47 = sld [smem:[%s46]]
  %s48 = scalar_lea.smem %s0, 24
  %s49 = sld [smem:[%s48]]
  %s50 = scalar_lea.smem %s0, 25
  %s51 = sld [smem:[%s50]]
  %s52 = scalar_lea.smem %s0, 26
  %s53 = sld [smem:[%s52]]
  %s54 = scalar_lea.smem %s0, 27
  %s55 = sld [smem:[%s54]]
  %s56 = scalar_lea.smem %s0, 28
  %s57 = sld [smem:[%s56]]
  %s58 = scalar_lea.smem %s0, 29
  %s59 = sld [smem:[%s58]]
  %s60 = sld [smem:[#allocation0]]
  $region206: #{tpu_custom_call.1} parent=0
    _
  %s62 = ssub.s32 1, %s60
  %s63 = scalar_select 0, %s62, %s60
  $region1: #{tpu_custom_call.1} parent=0
    #allocation2 [shape = 'u8[2048]{0}', space=vmem, size = 0x800, scoped, tag = 'input window, operand 1, single buffered']
    #allocation3 [shape = 's32[1]{0}', space=sflag, size = 0x4, scoped, tag = 'scoped memory for tpu_custom_call.1']
    #allocation4 [shape = 's32[1]{0}', space=sflag, size = 0x4, scoped, tag = 'scoped memory for tpu_custom_call.1']
    #allocation5 [shape = 'u8[512]{0}', space=vmem, size = 0x400, scoped, tag = 'input window, operand 2, single buffered']
    #allocation6 [shape = 's32[1]{0}', space=sflag, size = 0x4, scoped, tag = 'scoped memory for tpu_custom_call.1']
    #allocation7 [shape = 'u8[512]{0}', space=vmem, size = 0x400, scoped, tag = 'input window, operand 3, single buffered']
    #allocation8 [shape = 'u8[32768]{0}', space=vmem, size = 0x8000, scoped, tag = 'input window, operand 5, single buffered']
    #allocation9 [shape = 's32[1]{0}', space=sflag, size = 0x4, scoped, tag = 'scoped memory for tpu_custom_call.1']
    #allocation10 [shape = 'u8[32768]{0}', space=vmem, size = 0x8000, scoped, tag = 'input window, operand 6, single buffered']
    #allocation11 [shape = 'u8[512]{0}', space=vmem, size = 0x400, scoped, tag = 'input window, operand 7, single buffered']
    #allocation12 [shape = 's32[1]{0}', space=sflag, size = 0x4, scoped, tag = 'scoped memory for tpu_custom_call.1']
    #allocation13 [shape = 'u8[512]{0}', space=vmem, size = 0x400, scoped, tag = 'input window, operand 8, single buffered']
    #allocation14 [shape = 'u8[32768]{0}', space=vmem, size = 0x8000, scoped, tag = 'input window, operand 9, single buffered']
    #allocation15 [shape = 's32[1]{0}', space=sflag, size = 0x4, scoped, tag = 'scoped memory for tpu_custom_call.1']
    #allocation16 [shape = 'u8[32768]{0}', space=vmem, size = 0x8000, scoped, tag = 'input window, operand 10, single buffered']
    #allocation17 [shape = 'u8[32768]{0}', space=vmem, size = 0x8000, scoped, tag = 'input window, operand 11, single buffered']
    #allocation18 [shape = 's32[1]{0}', space=sflag, size = 0x4, scoped, tag = 'scoped memory for tpu_custom_call.1']
    #allocation19 [shape = 'u8[512]{0}', space=vmem, size = 0x400, scoped, tag = 'input window, operand 12, single buffered']
    #allocation20 [shape = 'u8[512]{0}', space=vmem, size = 0x400, scoped, tag = 'input window, operand 13, single buffered']
    #allocation21 [shape = 's32[1]{0}', space=sflag, size = 0x4, scoped, tag = 'scoped memory for tpu_custom_call.1']
    #allocation22 [shape = 'u8[32768]{0}', space=vmem, size = 0x8000, scoped, tag = 'input window, operand 14, single buffered']
    #allocation23 [shape = 'u8[32768]{0}', space=vmem, size = 0x8000, scoped, tag = 'input window, operand 15, single buffered']
    #allocation24 [shape = 's32[1]{0}', space=sflag, size = 0x4, scoped, tag = 'scoped memory for tpu_custom_call.1']
    #allocation25 [shape = 'u8[32768]{0}', space=vmem, size = 0x8000, scoped, tag = 'input window, operand 16, single buffered']
    #allocation26 [shape = 'u8[512]{0}', space=vmem, size = 0x400, scoped, tag = 'input window, operand 17, single buffered']
    #allocation27 [shape = 's32[1]{0}', space=sflag, size = 0x4, scoped, tag = 'scoped memory for tpu_custom_call.1']
    #allocation28 [shape = 'u8[512]{0}', space=vmem, size = 0x400, scoped, tag = 'input window, operand 18, single buffered']
    #allocation29 [shape = 'u8[32768]{0}', space=vmem, size = 0x8000, scoped, tag = 'input window, operand 20, single buffered']
    #allocation30 [shape = 's32[1]{0}', space=sflag, size = 0x4, scoped, tag = 'scoped memory for tpu_custom_call.1']
    #allocation31 [shape = 'u8[32768]{0}', space=vmem, size = 0x8000, scoped, tag = 'input window, operand 21, single buffered']
    #allocation32 [shape = 'u8[32768]{0}', space=vmem, size = 0x8000, scoped, tag = 'input window, operand 24, single buffered']
    #allocation33 [shape = 's32[1]{0}', space=sflag, size = 0x4, scoped, tag = 'scoped memory for tpu_custom_call.1']
    #allocation34 [shape = 'u8[1024]{0}', space=vmem, size = 0x400, scoped, tag = 'output window, operand 0, single buffered']
    %64 = vsyncpa [#allocation3], 0
    %65 = vsyncpa [#allocation6], 0
    %66 = vsyncpa [#allocation9], 0
    %67 = vsyncpa [#allocation12], 0
    %68 = vsyncpa [#allocation15], 0
    %69 = vsyncpa [#allocation18], 0
    %70 = vsyncpa [#allocation21], 0
    %71 = vsyncpa [#allocation24], 0
    %72 = vsyncpa [#allocation27], 0
    %73 = vsyncpa [#allocation30], 0
    %74 = vsyncpa [#allocation33], 0
    %75 = vsyncpa [#allocation4], 0
    // Predicated region
    $region2: #{tpu_custom_call.1} parent=1 // pred_check
      _
    $region3: #{tpu_custom_call.1} parent=1 // pred_check_branch
      %77 = sbr.rel (0) target = $region5
    $region4: #{tpu_custom_call.1} parent=1 // pred_region
      _
    $region5: #{tpu_custom_call.1} parent=1 // pred_fallthru
      _
    // Predicated region
    $region6: #{tpu_custom_call.1} parent=1 // pred_check
      _
    $region7: #{tpu_custom_call.1} parent=1 // pred_check_branch
      %79 = sbr.rel (0) target = $region9
    $region8: #{tpu_custom_call.1} parent=1 // pred_region
      %s81 = ssub.s32 64, 64
      %82 = vsyncadd [#allocation3], %s81
      %s84 = sshll.u32 [#allocation2], 4
      %s85 = int_to_ptr.vmem [resolvable:$true] %s84
      %87 = dma.hbm_to_vmem [thread:$0]  %s3, 64, %s85, [#allocation3]
    $region9: #{tpu_custom_call.1} parent=1 // pred_fallthru
      _
    // Predicated region
    $region10: #{tpu_custom_call.1} parent=1 // pred_check
      _
    $region11: #{tpu_custom_call.1} parent=1 // pred_check_branch
      %89 = sbr.rel (0) target = $region13
    $region12: #{tpu_custom_call.1} parent=1 // pred_region
      %s91 = ssub.s32 16, 16
      %92 = vsyncadd [#allocation6], %s91
      %s94 = sshll.u32 [#allocation5], 4
      %s95 = int_to_ptr.vmem [resolvable:$true] %s94
      %97 = dma.hbm_to_vmem [thread:$0]  %s5, 16, %s95, [#allocation6]
    $region13: #{tpu_custom_call.1} parent=1 // pred_fallthru
      _
    // Predicated region
    $region14: #{tpu_custom_call.1} parent=1 // pred_check
      _
    $region15: #{tpu_custom_call.1} parent=1 // pred_check_branch
      %99 = sbr.rel (0) target = $region17
    $region16: #{tpu_custom_call.1} parent=1 // pred_region
      %s101 = ssub.s32 16, 16
      %102 = vsyncadd [#allocation6], %s101
      %s104 = sshll.u32 [#allocation7], 4
      %s105 = int_to_ptr.vmem [resolvable:$true] %s104
      %107 = dma.hbm_to_vmem [thread:$0]  %s7, 16, %s105, [#allocation6]
    $region17: #{tpu_custom_call.1} parent=1 // pred_fallthru
      _
    // Predicated region
    $region18: #{tpu_custom_call.1} parent=1 // pred_check
      _
    $region19: #{tpu_custom_call.1} parent=1 // pred_check_branch
      %109 = sbr.rel (0) target = $region21
    $region20: #{tpu_custom_call.1} parent=1 // pred_region
      _
    $region21: #{tpu_custom_call.1} parent=1 // pred_fallthru
      _
    // Predicated region
    $region22: #{tpu_custom_call.1} parent=1 // pred_check
      _
    $region23: #{tpu_custom_call.1} parent=1 // pred_check_branch
      %111 = sbr.rel (0) target = $region25
    $region24: #{tpu_custom_call.1} parent=1 // pred_region
      %s113 = ssub.s32 1024, 1024
      %114 = vsyncadd [#allocation9], %s113
      %s115 = sshll.u32 [#allocation8], 4
      %s116 = int_to_ptr.vmem [resolvable:$true] %s115
      %121 = dma.hbm_to_vmem [thread:$0]  %s11, 1024, %s116, [#allocation9], 64, 64, 4
    $region25: #{tpu_custom_call.1} parent=1 // pred_fallthru
      _
    // Predicated region
    $region26: #{tpu_custom_call.1} parent=1 // pred_check
      _
    $region27: #{tpu_custom_call.1} parent=1 // pred_check_branch
      %123 = sbr.rel (0) target = $region29
    $region28: #{tpu_custom_call.1} parent=1 // pred_region
      %s125 = ssub.s32 1024, 1024
      %126 = vsyncadd [#allocation9], %s125
      %s127 = sshll.u32 [#allocation10], 4
      %s128 = int_to_ptr.vmem [resolvable:$true] %s127
      %133 = dma.hbm_to_vmem [thread:$0]  %s13, 1024, %s128, [#allocation9], 64, 64, 4
    $region29: #{tpu_custom_call.1} parent=1 // pred_fallthru
      _
    // Predicated region
    $region30: #{tpu_custom_call.1} parent=1 // pred_check
      _
    $region31: #{tpu_custom_call.1} parent=1 // pred_check_branch
      %135 = sbr.rel (0) target = $region33
    $region32: #{tpu_custom_call.1} parent=1 // pred_region
      %s137 = ssub.s32 16, 16
      %138 = vsyncadd [#allocation12], %s137
      %s140 = sshll.u32 [#allocation11], 4
      %s141 = int_to_ptr.vmem [resolvable:$true] %s140
      %143 = dma.hbm_to_vmem [thread:$0]  %s15, 16, %s141, [#allocation12]
    $region33: #{tpu_custom_call.1} parent=1 // pred_fallthru
      _
    // Predicated region
    $region34: #{tpu_custom_call.1} parent=1 // pred_check
      _
    $region35: #{tpu_custom_call.1} parent=1 // pred_check_branch
      %145 = sbr.rel (0) target = $region37
    $region36: #{tpu_custom_call.1} parent=1 // pred_region
      %s147 = ssub.s32 16, 16
      %148 = vsyncadd [#allocation12], %s147
      %s150 = sshll.u32 [#allocation13], 4
      %s151 = int_to_ptr.vmem [resolvable:$true] %s150
      %153 = dma.hbm_to_vmem [thread:$0]  %s17, 16, %s151, [#allocation12]
    $region37: #{tpu_custom_call.1} parent=1 // pred_fallthru
      _
    // Predicated region
    $region38: #{tpu_custom_call.1} parent=1 // pred_check
      _
    $region39: #{tpu_custom_call.1} parent=1 // pred_check_branch
      %155 = sbr.rel (0) target = $region41
    $region40: #{tpu_custom_call.1} parent=1 // pred_region
      %s157 = ssub.s32 1024, 1024
      %158 = vsyncadd [#allocation15], %s157
      %s159 = sshll.u32 [#allocation14], 4
      %s160 = int_to_ptr.vmem [resolvable:$true] %s159
      %165 = dma.hbm_to_vmem [thread:$0]  %s19, 1024, %s160, [#allocation15], 64, 64, 4
    $region41: #{tpu_custom_call.1} parent=1 // pred_fallthru
      _
    // Predicated region
    $region42: #{tpu_custom_call.1} parent=1 // pred_check
      _
    $region43: #{tpu_custom_call.1} parent=1 // pred_check_branch
      %167 = sbr.rel (0) target = $region45
    $region44: #{tpu_custom_call.1} parent=1 // pred_region
      %s169 = ssub.s32 1024, 1024
      %170 = vsyncadd [#allocation15], %s169
      %s171 = sshll.u32 [#allocation16], 4
      %s172 = int_to_ptr.vmem [resolvable:$true] %s171
      %177 = dma.hbm_to_vmem [thread:$0]  %s21, 1024, %s172, [#allocation15], 64, 64, 4
    $region45: #{tpu_custom_call.1} parent=1 // pred_fallthru
      _
    // Predicated region
    $region46: #{tpu_custom_call.1} parent=1 // pred_check
      _
    $region47: #{tpu_custom_call.1} parent=1 // pred_check_branch
      %179 = sbr.rel (0) target = $region49
    $region48: #{tpu_custom_call.1} parent=1 // pred_region
      %s181 = ssub.s32 1024, 1024
      %182 = vsyncadd [#allocation18], %s181
      %s183 = sshll.u32 [#allocation17], 4
      %s184 = int_to_ptr.vmem [resolvable:$true] %s183
      %189 = dma.hbm_to_vmem [thread:$0]  %s23, 1024, %s184, [#allocation18], 64, 64, 4
    $region49: #{tpu_custom_call.1} parent=1 // pred_fallthru
      _
    // Predicated region
    $region50: #{tpu_custom_call.1} parent=1 // pred_check
      _
    $region51: #{tpu_custom_call.1} parent=1 // pred_check_branch
      %191 = sbr.rel (0) target = $region53
    $region52: #{tpu_custom_call.1} parent=1 // pred_region
      %s193 = ssub.s32 16, 16
      %194 = vsyncadd [#allocation18], %s193
      %s196 = sshll.u32 [#allocation19], 4
      %s197 = int_to_ptr.vmem [resolvable:$true] %s196
      %199 = dma.hbm_to_vmem [thread:$0]  %s25, 16, %s197, [#allocation18]
    $region53: #{tpu_custom_call.1} parent=1 // pred_fallthru
      _
    // Predicated region
    $region54: #{tpu_custom_call.1} parent=1 // pred_check
      _
    $region55: #{tpu_custom_call.1} parent=1 // pred_check_branch
      %201 = sbr.rel (0) target = $region57
    $region56: #{tpu_custom_call.1} parent=1 // pred_region
      %s203 = ssub.s32 16, 16
      %204 = vsyncadd [#allocation21], %s203
      %s206 = sshll.u32 [#allocation20], 4
      %s207 = int_to_ptr.vmem [resolvable:$true] %s206
      %209 = dma.hbm_to_vmem [thread:$0]  %s27, 16, %s207, [#allocation21]
    $region57: #{tpu_custom_call.1} parent=1 // pred_fallthru
      _
    // Predicated region
    $region58: #{tpu_custom_call.1} parent=1 // pred_check
      _
    $region59: #{tpu_custom_call.1} parent=1 // pred_check_branch
      %211 = sbr.rel (0) target = $region61
    $region60: #{tpu_custom_call.1} parent=1 // pred_region
      %s213 = ssub.s32 1024, 1024
      %214 = vsyncadd [#allocation21], %s213
      %s215 = sshll.u32 [#allocation22], 4
      %s216 = int_to_ptr.vmem [resolvable:$true] %s215
      %221 = dma.hbm_to_vmem [thread:$0]  %s29, 1024, %s216, [#allocation21], 64, 64, 4
    $region61: #{tpu_custom_call.1} parent=1 // pred_fallthru
      _
    // Predicated region
    $region62: #{tpu_custom_call.1} parent=1 // pred_check
      _
    $region63: #{tpu_custom_call.1} parent=1 // pred_check_branch
      %223 = sbr.rel (0) target = $region65
    $region64: #{tpu_custom_call.1} parent=1 // pred_region
      %s225 = ssub.s32 1024, 1024
      %226 = vsyncadd [#allocation24], %s225
      %s227 = sshll.u32 [#allocation23], 4
      %s228 = int_to_ptr.vmem [resolvable:$true] %s227
      %233 = dma.hbm_to_vmem [thread:$0]  %s31, 1024, %s228, [#allocation24], 64, 64, 4
    $region65: #{tpu_custom_call.1} parent=1 // pred_fallthru
      _
    // Predicated region
    $region66: #{tpu_custom_call.1} parent=1 // pred_check
      _
    $region67: #{tpu_custom_call.1} parent=1 // pred_check_branch
      %235 = sbr.rel (0) target = $region69
    $region68: #{tpu_custom_call.1} parent=1 // pred_region
      %s237 = ssub.s32 1024, 1024
      %238 = vsyncadd [#allocation24], %s237
      %s239 = sshll.u32 [#allocation25], 4
      %s240 = int_to_ptr.vmem [resolvable:$true] %s239
      %245 = dma.hbm_to_vmem [thread:$0]  %s33, 1024, %s240, [#allocation24], 64, 64, 4
    $region69: #{tpu_custom_call.1} parent=1 // pred_fallthru
      _
    // Predicated region
    $region70: #{tpu_custom_call.1} parent=1 // pred_check
      _
    $region71: #{tpu_custom_call.1} parent=1 // pred_check_branch
      %247 = sbr.rel (0) target = $region73
    $region72: #{tpu_custom_call.1} parent=1 // pred_region
      %s249 = ssub.s32 16, 16
      %250 = vsyncadd [#allocation27], %s249
      %s252 = sshll.u32 [#allocation26], 4
      %s253 = int_to_ptr.vmem [resolvable:$true] %s252
      %255 = dma.hbm_to_vmem [thread:$0]  %s35, 16, %s253, [#allocation27]
    $region73: #{tpu_custom_call.1} parent=1 // pred_fallthru
      _
    // Predicated region
    $region74: #{tpu_custom_call.1} parent=1 // pred_check
      _
    $region75: #{tpu_custom_call.1} parent=1 // pred_check_branch
      %257 = sbr.rel (0) target = $region77
    $region76: #{tpu_custom_call.1} parent=1 // pred_region
      %s259 = ssub.s32 16, 16
      %260 = vsyncadd [#allocation27], %s259
      %s262 = sshll.u32 [#allocation28], 4
      %s263 = int_to_ptr.vmem [resolvable:$true] %s262
      %265 = dma.hbm_to_vmem [thread:$0]  %s37, 16, %s263, [#allocation27]
    $region77: #{tpu_custom_call.1} parent=1 // pred_fallthru
      _
    // Predicated region
    $region78: #{tpu_custom_call.1} parent=1 // pred_check
      _
    $region79: #{tpu_custom_call.1} parent=1 // pred_check_branch
      %267 = sbr.rel (0) target = $region81
    $region80: #{tpu_custom_call.1} parent=1 // pred_region
      _
    $region81: #{tpu_custom_call.1} parent=1 // pred_fallthru
      _
    // Predicated region
    $region82: #{tpu_custom_call.1} parent=1 // pred_check
      _
    $region83: #{tpu_custom_call.1} parent=1 // pred_check_branch
      %269 = sbr.rel (0) target = $region85
    $region84: #{tpu_custom_call.1} parent=1 // pred_region
      %s271 = ssub.s32 1024, 1024
      %272 = vsyncadd [#allocation30], %s271
      %s273 = sshll.u32 [#allocation29], 4
      %s274 = int_to_ptr.vmem [resolvable:$true] %s273
      %279 = dma.hbm_to_vmem [thread:$0]  %s41, 1024, %s274, [#allocation30], 64, 64, 4
    $region85: #{tpu_custom_call.1} parent=1 // pred_fallthru
      _
    // Predicated region
    $region86: #{tpu_custom_call.1} parent=1 // pred_check
      _
    $region87: #{tpu_custom_call.1} parent=1 // pred_check_branch
      %281 = sbr.rel (0) target = $region89
    $region88: #{tpu_custom_call.1} parent=1 // pred_region
      %s283 = ssub.s32 1024, 1024
      %284 = vsyncadd [#allocation30], %s283
      %s285 = sshll.u32 [#allocation31], 4
      %s286 = int_to_ptr.vmem [resolvable:$true] %s285
      %291 = dma.hbm_to_vmem [thread:$0]  %s43, 1024, %s286, [#allocation30], 64, 64, 4
    $region89: #{tpu_custom_call.1} parent=1 // pred_fallthru
      _
    // Predicated region
    $region90: #{tpu_custom_call.1} parent=1 // pred_check
      _
    $region91: #{tpu_custom_call.1} parent=1 // pred_check_branch
      %293 = sbr.rel (0) target = $region93
    $region92: #{tpu_custom_call.1} parent=1 // pred_region
      _
    $region93: #{tpu_custom_call.1} parent=1 // pred_fallthru
      _
    // Predicated region
    $region94: #{tpu_custom_call.1} parent=1 // pred_check
      _
    $region95: #{tpu_custom_call.1} parent=1 // pred_check_branch
      %295 = sbr.rel (0) target = $region97
    $region96: #{tpu_custom_call.1} parent=1 // pred_region
      _
    $region97: #{tpu_custom_call.1} parent=1 // pred_fallthru
      _
    // Predicated region
    $region98: #{tpu_custom_call.1} parent=1 // pred_check
      _
    $region99: #{tpu_custom_call.1} parent=1 // pred_check_branch
      %297 = sbr.rel (0) target = $region101
    $region100: #{tpu_custom_call.1} parent=1 // pred_region
      %s299 = ssub.s32 1024, 1024
      %300 = vsyncadd [#allocation33], %s299
      %s301 = sshll.u32 [#allocation32], 4
      %s302 = int_to_ptr.vmem [resolvable:$true] %s301
      %307 = dma.hbm_to_vmem [thread:$0]  %s49, 1024, %s302, [#allocation33], 64, 64, 4
    $region101: #{tpu_custom_call.1} parent=1 // pred_fallthru
      _
    // Predicated region
    $region102: #{tpu_custom_call.1} parent=1 // pred_check
      _
    $region103: #{tpu_custom_call.1} parent=1 // pred_check_branch
      %309 = sbr.rel (0) target = $region105
    $region104: #{tpu_custom_call.1} parent=1 // pred_region
      _
    $region105: #{tpu_custom_call.1} parent=1 // pred_fallthru
      _
    // Predicated region
    $region106: #{tpu_custom_call.1} parent=1 // pred_check
      _
    $region107: #{tpu_custom_call.1} parent=1 // pred_check_branch
      %311 = sbr.rel (0) target = $region109
    $region108: #{tpu_custom_call.1} parent=1 // pred_region
      _
    $region109: #{tpu_custom_call.1} parent=1 // pred_fallthru
      _
    // Predicated region
    $region110: #{tpu_custom_call.1} parent=1 // pred_check
      _
    $region111: #{tpu_custom_call.1} parent=1 // pred_check_branch
      %313 = sbr.rel (0) target = $region113
    $region112: #{tpu_custom_call.1} parent=1 // pred_region
      _
    $region113: #{tpu_custom_call.1} parent=1 // pred_fallthru
      _
    // Predicated region
    $region114: #{tpu_custom_call.1} parent=1 // pred_check
      _
    $region115: #{tpu_custom_call.1} parent=1 // pred_check_branch
      %315 = sbr.rel (0) target = $region117
    $region116: #{tpu_custom_call.1} parent=1 // pred_region
      _
    $region117: #{tpu_custom_call.1} parent=1 // pred_fallthru
      _
    // Predicated region
    $region118: #{tpu_custom_call.1} parent=1 // pred_check
      _
    $region119: #{tpu_custom_call.1} parent=1 // pred_check_branch
      %317 = sbr.rel (0) target = $region121
    $region120: #{tpu_custom_call.1} parent=1 // pred_region
      %318 = dma.done [#allocation3], 64
    $region121: #{tpu_custom_call.1} parent=1 // pred_fallthru
      _
    // Predicated region
    $region122: #{tpu_custom_call.1} parent=1 // pred_check
      _
    $region123: #{tpu_custom_call.1} parent=1 // pred_check_branch
      %320 = sbr.rel (0) target = $region125
    $region124: #{tpu_custom_call.1} parent=1 // pred_region
      %321 = dma.done [#allocation6], 16
    $region125: #{tpu_custom_call.1} parent=1 // pred_fallthru
      _
    // Predicated region
    $region126: #{tpu_custom_call.1} parent=1 // pred_check
      _
    $region127: #{tpu_custom_call.1} parent=1 // pred_check_branch
      %323 = sbr.rel (0) target = $region129
    $region128: #{tpu_custom_call.1} parent=1 // pred_region
      %324 = dma.done [#allocation6], 16
    $region129: #{tpu_custom_call.1} parent=1 // pred_fallthru
      _
    // Predicated region
    $region130: #{tpu_custom_call.1} parent=1 // pred_check
      _
    $region131: #{tpu_custom_call.1} parent=1 // pred_check_branch
      %326 = sbr.rel (0) target = $region133
    $region132: #{tpu_custom_call.1} parent=1 // pred_region
      %327 = dma.done [#allocation9], 1024
    $region133: #{tpu_custom_call.1} parent=1 // pred_fallthru
      _
    // Predicated region
    $region134: #{tpu_custom_call.1} parent=1 // pred_check
      _
    $region135: #{tpu_custom_call.1} parent=1 // pred_check_branch
      %329 = sbr.rel (0) target = $region137
    $region136: #{tpu_custom_call.1} parent=1 // pred_region
      %330 = dma.done [#allocation9], 1024
    $region137: #{tpu_custom_call.1} parent=1 // pred_fallthru
      _
    // Predicated region
    $region138: #{tpu_custom_call.1} parent=1 // pred_check
      _
    $region139: #{tpu_custom_call.1} parent=1 // pred_check_branch
      %332 = sbr.rel (0) target = $region141
    $region140: #{tpu_custom_call.1} parent=1 // pred_region
      %333 = dma.done [#allocation12], 16
    $region141: #{tpu_custom_call.1} parent=1 // pred_fallthru
      _
    // Predicated region
    $region142: #{tpu_custom_call.1} parent=1 // pred_check
      _
    $region143: #{tpu_custom_call.1} parent=1 // pred_check_branch
      %335 = sbr.rel (0) target = $region145
    $region144: #{tpu_custom_call.1} parent=1 // pred_region
      %336 = dma.done [#allocation12], 16
    $region145: #{tpu_custom_call.1} parent=1 // pred_fallthru
      _
    // Predicated region
    $region146: #{tpu_custom_call.1} parent=1 // pred_check
      _
    $region147: #{tpu_custom_call.1} parent=1 // pred_check_branch
      %338 = sbr.rel (0) target = $region149
    $region148: #{tpu_custom_call.1} parent=1 // pred_region
      %339 = dma.done [#allocation15], 1024
    $region149: #{tpu_custom_call.1} parent=1 // pred_fallthru
      _
    // Predicated region
    $region150: #{tpu_custom_call.1} parent=1 // pred_check
      _
    $region151: #{tpu_custom_call.1} parent=1 // pred_check_branch
      %341 = sbr.rel (0) target = $region153
    $region152: #{tpu_custom_call.1} parent=1 // pred_region
      %342 = dma.done [#allocation15], 1024
    $region153: #{tpu_custom_call.1} parent=1 // pred_fallthru
      _
    // Predicated region
    $region154: #{tpu_custom_call.1} parent=1 // pred_check
      _
    $region155: #{tpu_custom_call.1} parent=1 // pred_check_branch
      %344 = sbr.rel (0) target = $region157
    $region156: #{tpu_custom_call.1} parent=1 // pred_region
      %345 = dma.done [#allocation18], 1024
    $region157: #{tpu_custom_call.1} parent=1 // pred_fallthru
      _
    // Predicated region
    $region158: #{tpu_custom_call.1} parent=1 // pred_check
      _
    $region159: #{tpu_custom_call.1} parent=1 // pred_check_branch
      %347 = sbr.rel (0) target = $region161
    $region160: #{tpu_custom_call.1} parent=1 // pred_region
      %348 = dma.done [#allocation18], 16
    $region161: #{tpu_custom_call.1} parent=1 // pred_fallthru
      _
    // Predicated region
    $region162: #{tpu_custom_call.1} parent=1 // pred_check
      _
    $region163: #{tpu_custom_call.1} parent=1 // pred_check_branch
      %350 = sbr.rel (0) target = $region165
    $region164: #{tpu_custom_call.1} parent=1 // pred_region
      %351 = dma.done [#allocation21], 16
    $region165: #{tpu_custom_call.1} parent=1 // pred_fallthru
      _
    // Predicated region
    $region166: #{tpu_custom_call.1} parent=1 // pred_check
      _
    $region167: #{tpu_custom_call.1} parent=1 // pred_check_branch
      %353 = sbr.rel (0) target = $region169
    $region168: #{tpu_custom_call.1} parent=1 // pred_region
      %354 = dma.done [#allocation21], 1024
    $region169: #{tpu_custom_call.1} parent=1 // pred_fallthru
      _
    // Predicated region
    $region170: #{tpu_custom_call.1} parent=1 // pred_check
      _
    $region171: #{tpu_custom_call.1} parent=1 // pred_check_branch
      %356 = sbr.rel (0) target = $region173
    $region172: #{tpu_custom_call.1} parent=1 // pred_region
      %357 = dma.done [#allocation24], 1024
    $region173: #{tpu_custom_call.1} parent=1 // pred_fallthru
      _
    // Predicated region
    $region174: #{tpu_custom_call.1} parent=1 // pred_check
      _
    $region175: #{tpu_custom_call.1} parent=1 // pred_check_branch
      %359 = sbr.rel (0) target = $region177
    $region176: #{tpu_custom_call.1} parent=1 // pred_region
      %360 = dma.done [#allocation24], 1024
    $region177: #{tpu_custom_call.1} parent=1 // pred_fallthru
      _
    // Predicated region
    $region178: #{tpu_custom_call.1} parent=1 // pred_check
      _
    $region179: #{tpu_custom_call.1} parent=1 // pred_check_branch
      %362 = sbr.rel (0) target = $region181
    $region180: #{tpu_custom_call.1} parent=1 // pred_region
      %363 = dma.done [#allocation27], 16
    $region181: #{tpu_custom_call.1} parent=1 // pred_fallthru
      _
    // Predicated region
    $region182: #{tpu_custom_call.1} parent=1 // pred_check
      _
    $region183: #{tpu_custom_call.1} parent=1 // pred_check_branch
      %365 = sbr.rel (0) target = $region185
    $region184: #{tpu_custom_call.1} parent=1 // pred_region
      %366 = dma.done [#allocation27], 16
    $region185: #{tpu_custom_call.1} parent=1 // pred_fallthru
      _
    // Predicated region
    $region186: #{tpu_custom_call.1} parent=1 // pred_check
      _
    $region187: #{tpu_custom_call.1} parent=1 // pred_check_branch
      %368 = sbr.rel (0) target = $region189
    $region188: #{tpu_custom_call.1} parent=1 // pred_region
      %369 = dma.done [#allocation30], 1024
    $region189: #{tpu_custom_call.1} parent=1 // pred_fallthru
      _
    // Predicated region
    $region190: #{tpu_custom_call.1} parent=1 // pred_check
      _
    $region191: #{tpu_custom_call.1} parent=1 // pred_check_branch
      %371 = sbr.rel (0) target = $region193
    $region192: #{tpu_custom_call.1} parent=1 // pred_region
      %372 = dma.done [#allocation30], 1024
    $region193: #{tpu_custom_call.1} parent=1 // pred_fallthru
      _
    // Predicated region
    $region194: #{tpu_custom_call.1} parent=1 // pred_check
      _
    $region195: #{tpu_custom_call.1} parent=1 // pred_check_branch
      %374 = sbr.rel (0) target = $region197
    $region196: #{tpu_custom_call.1} parent=1 // pred_region
      %375 = dma.done [#allocation33], 1024
    $region197: #{tpu_custom_call.1} parent=1 // pred_fallthru
      _
    %v377 = vld [vmem:[%s53] sm:$0xff]
    %v378 = vld [vmem:[%s53 + $0x8] sm:$0xff]
    %380 = vset.pattern.permute.xlu0 0
    %381 = vperm.xlu0 %380, %v377
    %v382 = vpop.permute.xlu0 %381
    %385 = vset.pattern.permute.xlu0 0
    %386 = vperm.xlu0 %385, %v378
    %v387 = vpop.permute.xlu0 %386
    %v389 = vld [vmem:[%s55] sm:$0xff]
    %v390 = vld [vmem:[%s55 + $0x8] sm:$0xff]
    %392 = vset.pattern.permute.xlu0 0
    %393 = vperm.xlu0 %392, %v389
    %v394 = vpop.permute.xlu0 %393
    %397 = vset.pattern.permute.xlu0 0
    %398 = vperm.xlu0 %397, %v390
    %v399 = vpop.permute.xlu0 %398
    %v401 = vld [vmem:[%s57] sm:$0xff]
    %v402 = vld [vmem:[%s57 + $0x8] sm:$0xff]
    %404 = vset.pattern.permute.xlu0 0
    %405 = vperm.xlu0 %404, %v401
    %v406 = vpop.permute.xlu0 %405
    %409 = vset.pattern.permute.xlu0 0
    %410 = vperm.xlu0 %409, %v402
    %v411 = vpop.permute.xlu0 %410
    %v413 = vld [vmem:[%s1] sm:$0xf]
    %v414 = vld [vmem:[%s1 + $0x4] sm:$0xf]
    %v415 = vld [vmem:[#allocation2] sm:$0xf]
    %v418 = vunpack.c.l.b16 %v413
    %v419 = vunpack.c.l.b16 %v414
    %v420 = vpack.c.b16 %v419, %v418
    %vm421 = vcmask 64512
    %v423 = vsel %vm421, %v420, 0
    %vm425 = vcmask 1043456
    %v427 = vsel %vm425, %v415, 0
    %429 = vmatprep.subr.bf16.mxu0 0
    %430 = vmatpush1.bf16.msra.mxu0 %v427
    %431 = vmatprep.subr.bf16.mxu0 0
    %432 = vmatpush1.bf16.msra.mxu0 0
    %433 = vmatprep.subr.bf16.mxu0 0
    %434 = vmatpush1.bf16.msra.mxu0 0
    %435 = vmatprep.subr.bf16.mxu0 0
    %436 = vmatpush1.bf16.msra.mxu0 0
    %437 = vmatprep.subr.bf16.mxu0 0
    %438 = vmatpush1.bf16.msra.mxu0 0
    %439 = vmatprep.subr.bf16.mxu0 0
    %440 = vmatpush1.bf16.msra.mxu0 0
    %441 = vmatprep.subr.bf16.mxu0 0
    %442 = vmatpush1.bf16.msra.mxu0 0
    %443 = vmatprep.subr.bf16.mxu0 0
    %444 = vmatpush1.bf16.msra.mxu0 0
    %445 = vmatprep.subr.bf16.mxu0 0
    %446 = vmatpush1.bf16.msra.mxu0 0
    %447 = vmatprep.subr.bf16.mxu0 0
    %448 = vmatpush1.bf16.msra.mxu0 0
    %449 = vmatprep.subr.bf16.mxu0 0
    %450 = vmatpush1.bf16.msra.mxu0 0
    %451 = vmatprep.subr.bf16.mxu0 0
    %452 = vmatpush1.bf16.msra.mxu0 0
    %453 = vmatprep.subr.bf16.mxu0 0
    %454 = vmatpush1.bf16.msra.mxu0 0
    %455 = vmatprep.subr.bf16.mxu0 0
    %456 = vmatpush1.bf16.msra.mxu0 0
    %457 = vmatprep.subr.bf16.mxu0 0
    %458 = vmatpush1.bf16.msra.mxu0 0
    %459 = vmatprep.subr.bf16.mxu0 0
    %460 = vmatpush1.bf16.msra.mxu0 0
    %461 = vmatprep.mubr.bf16.mxu0 0
    %462 = vmatmul.mubr.bf16.gmra.mrb[0].mxu0 %v423
    %v463 = vpop.f32.mrb[0].mxu0
    %v464 = vadd.f32 0.0, %v463
    %v465 = vpop.f32.mrb[0].mxu0
    %v466 = vpop.f32.mrb[0].mxu0
    %v467 = vadd.f32 0.0, %v466
    %v468 = vpop.f32.mrb[0].mxu0
    %469 = vdwg.mxu0
    %v470 = vlaneseq
    %v471 = vshrl.u32 %v470, 7
    %v472 = vsub.s32 0, %v471
    %v473 = vrot.slane %v464, %v472
    %v474 = vsub.f32 %v464, %v473
    %v475 = vsub.f32 %v467, %v473
    %v476 = vmul.f32 %v474, %v406
    %v477 = vmul.f32 %v475, %v411
    %v478 = vadd.f32 %v476, %v477
    %v479 = vrot.slane %v478, 4
    %v480 = vadd.f32 %v478, %v479
    %v481 = vrot.slane %v480, 2
    %v482 = vadd.f32 %v480, %v481
    %v483 = vrot.slane %v482, 1
    %v484 = vadd.f32 %v482, %v483
    %v485 = vmul.f32 %v476, %v476
    %v486 = vmul.f32 %v477, %v477
    %v487 = vadd.f32 %v485, %v486
    %v488 = vrot.slane %v487, 4
    %v489 = vadd.f32 %v487, %v488
    %v490 = vrot.slane %v489, 2
    %v491 = vadd.f32 %v489, %v490
    %v492 = vrot.slane %v491, 1
    %v493 = vadd.f32 %v491, %v492
    %v494 = vmul.f32 %v484, 0.0625
    %v495 = vmul.f32 %v493, 0.0625
    %v496 = vmul.f32 %v494, %v494
    %v497 = vsub.f32 %v495, %v496
    %v498 = vld [vmem:[#allocation5] sm:$0x1]
    %v499 = vadd.f32 %v497, 1e-05
    %v500 = vrsqrt.pop %v499
    %v501 = vmul.f32 %v498, %v500
    %v502 = vld [vmem:[#allocation7] sm:$0x1]
    %v503 = vadd.f32 %v494, %v464
    %v504 = vmul.f32 %v503, %v501
    %v505 = vsub.f32 %v502, %v504
    %v507 = vlaneseq
    %v508 = vshrl.u32 %v507, 7
    %v509 = vsub.s32 0, %v508
    %v510 = vrot.slane %v501, %v509
    %v512 = vmul.f32 %v464, %v510
    %v513 = vmul.f32 %v467, %v510
    %v515 = vlaneseq
    %v516 = vshrl.u32 %v515, 7
    %v517 = vsub.s32 0, %v516
    %v518 = vrot.slane %v505, %v517
    %v520 = vadd.f32 %v512, %v518
    %v521 = vadd.f32 %v513, %v518
    %v522 = vmax.f32 %v520, 0.0
    %v523 = vmax.f32 %v521, 0.0
    %v524 = vpack.c.bf16 %v523, %v522
    %v525 = vunpack.c.l.bf16 %v524
    %v526 = vunpack.c.h.bf16 %v524
    %v527 = vrot.slane %v525, 7
    %v528 = vrot.slane %v526, 7
    %v529 = vlaneseq
    %v530 = vshrl.u32 %v529, 7
    %vm531 = vcmp.lt.s32.totalorder %v530, 1
    %v532 = vsel %vm531, %v527, %v528
    %v533 = vsel %vm531, %v528, %v527
    %v534 = vmul.f32 %v533, %v382
    %v535 = vmul.f32 %v532, %v387
    %v536 = vpack.c.bf16 %v535, %v534
    %v537 = vrot.slane %v525, 1
    %v538 = vrot.slane %v526, 1
    %vm539 = vcmp.lt.s32.totalorder %v530, 7
    %v540 = vsel %vm539, %v537, %v538
    %v541 = vsel %vm539, %v538, %v537
    %v542 = vmul.f32 %v540, %v394
    %v543 = vmul.f32 %v541, %v399
    %v544 = vpack.c.bf16 %v543, %v542
    %v545 = vld [vmem:[#allocation8] sm:$0xf]
    %v546 = vld [vmem:[#allocation8 + $0x4] sm:$0xf]
    %v547 = vld [vmem:[#allocation8 + $0x8] sm:$0xf]
    %v548 = vld [vmem:[#allocation8 + $0xc] sm:$0xf]
    %v549 = vld [vmem:[#allocation8 + $0x10] sm:$0xf]
    %v550 = vld [vmem:[#allocation8 + $0x14] sm:$0xf]
    %v551 = vld [vmem:[#allocation8 + $0x18] sm:$0xf]
    %v552 = vld [vmem:[#allocation8 + $0x1c] sm:$0xf]
    %v553 = vld [vmem:[#allocation8 + $0x20] sm:$0xf]
    %v554 = vld [vmem:[#allocation8 + $0x24] sm:$0xf]
    %v555 = vld [vmem:[#allocation8 + $0x28] sm:$0xf]
    %v556 = vld [vmem:[#allocation8 + $0x2c] sm:$0xf]
    %v557 = vld [vmem:[#allocation8 + $0x30] sm:$0xf]
    %v558 = vld [vmem:[#allocation8 + $0x34] sm:$0xf]
    %v559 = vld [vmem:[#allocation8 + $0x38] sm:$0xf]
    %v560 = vld [vmem:[#allocation8 + $0x3c] sm:$0xf]
    %v561 = vld [vmem:[%s9] sm:$0xf]
    %v562 = vld [vmem:[%s9 + $0x4] sm:$0xf]
    %v563 = vld [vmem:[%s9 + $0x8] sm:$0xf]
    %v564 = vld [vmem:[%s9 + $0xc] sm:$0xf]
    %v565 = vld [vmem:[%s9 + $0x10] sm:$0xf]
    %v566 = vld [vmem:[%s9 + $0x14] sm:$0xf]
    %v567 = vld [vmem:[%s9 + $0x18] sm:$0xf]
    %v568 = vld [vmem:[%s9 + $0x1c] sm:$0xf]
    %v569 = vld [vmem:[%s9 + $0x20] sm:$0xf]
    %v570 = vld [vmem:[%s9 + $0x24] sm:$0xf]
    %v571 = vld [vmem:[%s9 + $0x28] sm:$0xf]
    %v572 = vld [vmem:[%s9 + $0x2c] sm:$0xf]
    %v573 = vld [vmem:[%s9 + $0x30] sm:$0xf]
    %v574 = vld [vmem:[%s9 + $0x34] sm:$0xf]
    %v575 = vld [vmem:[%s9 + $0x38] sm:$0xf]
    %v576 = vld [vmem:[%s9 + $0x3c] sm:$0xf]
    %v593 = vunpack.c.l.b16 %v561
    %v594 = vunpack.c.l.b16 %v562
    %v595 = vunpack.c.l.b16 %v563
    %v596 = vunpack.c.l.b16 %v564
    %v597 = vunpack.c.l.b16 %v565
    %v598 = vunpack.c.l.b16 %v566
    %v599 = vunpack.c.l.b16 %v567
    %v600 = vunpack.c.l.b16 %v568
    %v601 = vunpack.c.l.b16 %v569
    %v602 = vunpack.c.l.b16 %v570
    %v603 = vunpack.c.l.b16 %v571
    %v604 = vunpack.c.l.b16 %v572
    %v605 = vunpack.c.l.b16 %v573
    %v606 = vunpack.c.l.b16 %v574
    %v607 = vunpack.c.l.b16 %v575
    %v608 = vunpack.c.l.b16 %v576
    %v609 = vpack.c.b16 %v594, %v593
    %v610 = vpack.c.b16 %v596, %v595
    %v611 = vpack.c.b16 %v598, %v597
    %v612 = vpack.c.b16 %v600, %v599
    %v613 = vpack.c.b16 %v602, %v601
    %v614 = vpack.c.b16 %v604, %v603
    %v615 = vpack.c.b16 %v606, %v605
    %v616 = vpack.c.b16 %v608, %v607
    %625 = vmatprep.subr.bf16.mxu0 0
    %626 = vmatpush1.bf16.msra.mxu0 %v609
    %627 = vmatprep.subr.bf16.mxu0 0
    %628 = vmatpush1.bf16.msra.mxu0 %v610
    %629 = vmatprep.subr.bf16.mxu0 0
    %630 = vmatpush1.bf16.msra.mxu0 %v611
    %631 = vmatprep.subr.bf16.mxu0 0
    %632 = vmatpush1.bf16.msra.mxu0 %v612
    %633 = vmatprep.subr.bf16.mxu0 0
    %634 = vmatpush1.bf16.msra.mxu0 %v613
    %635 = vmatprep.subr.bf16.mxu0 0
    %636 = vmatpush1.bf16.msra.mxu0 %v614
    %637 = vmatprep.subr.bf16.mxu0 0
    %638 = vmatpush1.bf16.msra.mxu0 %v615
    %639 = vmatprep.subr.bf16.mxu0 0
    %640 = vmatpush1.bf16.msra.mxu0 %v616
    %641 = vmatprep.subr.bf16.mxu0 0
    %642 = vmatpush1.bf16.msra.mxu0 0
    %643 = vmatprep.subr.bf16.mxu0 0
    %644 = vmatpush1.bf16.msra.mxu0 0
    %645 = vmatprep.subr.bf16.mxu0 0
    %646 = vmatpush1.bf16.msra.mxu0 0
    %647 = vmatprep.subr.bf16.mxu0 0
    %648 = vmatpush1.bf16.msra.mxu0 0
    %649 = vmatprep.subr.bf16.mxu0 0
    %650 = vmatpush1.bf16.msra.mxu0 0
    %651 = vmatprep.subr.bf16.mxu0 0
    %652 = vmatpush1.bf16.msra.mxu0 0
    %653 = vmatprep.subr.bf16.mxu0 0
    %654 = vmatpush1.bf16.msra.mxu0 0
    %655 = vmatprep.subr.bf16.mxu0 0
    %656 = vmatpush1.bf16.msra.mxu0 0
    %657 = vmatprep.mubr.bf16.mxu0 0
    %658 = vmatmul.mubr.bf16.gmra.mrb[0].mxu0 %v536
    %v659 = vpop.f32.mrb[0].mxu0
    %v660 = vadd.f32 0.0, %v659
    %v661 = vpop.f32.mrb[0].mxu0
    %v662 = vpop.f32.mrb[0].mxu0
    %v663 = vadd.f32 0.0, %v662
    %v664 = vpop.f32.mrb[0].mxu0
    %665 = vdwg.mxu0
    %v682 = vunpack.c.l.b16 %v545
    %v683 = vunpack.c.l.b16 %v546
    %v684 = vunpack.c.l.b16 %v547
    %v685 = vunpack.c.l.b16 %v548
    %v686 = vunpack.c.l.b16 %v549
    %v687 = vunpack.c.l.b16 %v550
    %v688 = vunpack.c.l.b16 %v551
    %v689 = vunpack.c.l.b16 %v552
    %v690 = vunpack.c.l.b16 %v553
    %v691 = vunpack.c.l.b16 %v554
    %v692 = vunpack.c.l.b16 %v555
    %v693 = vunpack.c.l.b16 %v556
    %v694 = vunpack.c.l.b16 %v557
    %v695 = vunpack.c.l.b16 %v558
    %v696 = vunpack.c.l.b16 %v559
    %v697 = vunpack.c.l.b16 %v560
    %v698 = vpack.c.b16 %v683, %v682
    %v699 = vpack.c.b16 %v685, %v684
    %v700 = vpack.c.b16 %v687, %v686
    %v701 = vpack.c.b16 %v689, %v688
    %v702 = vpack.c.b16 %v691, %v690
    %v703 = vpack.c.b16 %v693, %v692
    %v704 = vpack.c.b16 %v695, %v694
    %v705 = vpack.c.b16 %v697, %v696
    %714 = vmatprep.subr.bf16.mxu0 0
    %715 = vmatpush1.bf16.msra.mxu0 %v698
    %716 = vmatprep.subr.bf16.mxu0 0
    %717 = vmatpush1.bf16.msra.mxu0 %v699
    %718 = vmatprep.subr.bf16.mxu0 0
    %719 = vmatpush1.bf16.msra.mxu0 %v700
    %720 = vmatprep.subr.bf16.mxu0 0
    %721 = vmatpush1.bf16.msra.mxu0 %v701
    %722 = vmatprep.subr.bf16.mxu0 0
    %723 = vmatpush1.bf16.msra.mxu0 %v702
    %724 = vmatprep.subr.bf16.mxu0 0
    %725 = vmatpush1.bf16.msra.mxu0 %v703
    %726 = vmatprep.subr.bf16.mxu0 0
    %727 = vmatpush1.bf16.msra.mxu0 %v704
    %728 = vmatprep.subr.bf16.mxu0 0
    %729 = vmatpush1.bf16.msra.mxu0 %v705
    %730 = vmatprep.subr.bf16.mxu0 0
    %731 = vmatpush1.bf16.msra.mxu0 0
    %732 = vmatprep.subr.bf16.mxu0 0
    %733 = vmatpush1.bf16.msra.mxu0 0
    %734 = vmatprep.subr.bf16.mxu0 0
    %735 = vmatpush1.bf16.msra.mxu0 0
    %736 = vmatprep.subr.bf16.mxu0 0
    %737 = vmatpush1.bf16.msra.mxu0 0
    %738 = vmatprep.subr.bf16.mxu0 0
    %739 = vmatpush1.bf16.msra.mxu0 0
    %740 = vmatprep.subr.bf16.mxu0 0
    %741 = vmatpush1.bf16.msra.mxu0 0
    %742 = vmatprep.subr.bf16.mxu0 0
    %743 = vmatpush1.bf16.msra.mxu0 0
    %744 = vmatprep.subr.bf16.mxu0 0
    %745 = vmatpush1.bf16.msra.mxu0 0
    %746 = vmatprep.mubr.bf16.mxu0 0
    %747 = vmatmul.mubr.bf16.gmra.mrb[0].mxu0 %v524
    %v748 = vpop.f32.mrb[0].mxu0
    %v749 = vadd.f32 %v660, %v748
    %v750 = vpop.f32.mrb[0].mxu0
    %v751 = vpop.f32.mrb[0].mxu0
    %v752 = vadd.f32 %v663, %v751
    %v753 = vpop.f32.mrb[0].mxu0
    %754 = vdwg.mxu0
    %v755 = vld [vmem:[#allocation10] sm:$0xf]
    %v756 = vld [vmem:[#allocation10 + $0x4] sm:$0xf]
    %v757 = vld [vmem:[#allocation10 + $0x8] sm:$0xf]
    %v758 = vld [vmem:[#allocation10 + $0xc] sm:$0xf]
    %v759 = vld [vmem:[#allocation10 + $0x10] sm:$0xf]
    %v760 = vld [vmem:[#allocation10 + $0x14] sm:$0xf]
    %v761 = vld [vmem:[#allocation10 + $0x18] sm:$0xf]
    %v762 = vld [vmem:[#allocation10 + $0x1c] sm:$0xf]
    %v763 = vld [vmem:[#allocation10 + $0x20] sm:$0xf]
    %v764 = vld [vmem:[#allocation10 + $0x24] sm:$0xf]
    %v765 = vld [vmem:[#allocation10 + $0x28] sm:$0xf]
    %v766 = vld [vmem:[#allocation10 + $0x2c] sm:$0xf]
    %v767 = vld [vmem:[#allocation10 + $0x30] sm:$0xf]
    %v768 = vld [vmem:[#allocation10 + $0x34] sm:$0xf]
    %v769 = vld [vmem:[#allocation10 + $0x38] sm:$0xf]
    %v770 = vld [vmem:[#allocation10 + $0x3c] sm:$0xf]
    %v787 = vunpack.c.l.b16 %v755
    %v788 = vunpack.c.l.b16 %v756
    %v789 = vunpack.c.l.b16 %v757
    %v790 = vunpack.c.l.b16 %v758
    %v791 = vunpack.c.l.b16 %v759
    %v792 = vunpack.c.l.b16 %v760
    %v793 = vunpack.c.l.b16 %v761
    %v794 = vunpack.c.l.b16 %v762
    %v795 = vunpack.c.l.b16 %v763
    %v796 = vunpack.c.l.b16 %v764
    %v797 = vunpack.c.l.b16 %v765
    %v798 = vunpack.c.l.b16 %v766
    %v799 = vunpack.c.l.b16 %v767
    %v800 = vunpack.c.l.b16 %v768
    %v801 = vunpack.c.l.b16 %v769
    %v802 = vunpack.c.l.b16 %v770
    %v803 = vpack.c.b16 %v788, %v787
    %v804 = vpack.c.b16 %v790, %v789
    %v805 = vpack.c.b16 %v792, %v791
    %v806 = vpack.c.b16 %v794, %v793
    %v807 = vpack.c.b16 %v796, %v795
    %v808 = vpack.c.b16 %v798, %v797
    %v809 = vpack.c.b16 %v800, %v799
    %v810 = vpack.c.b16 %v802, %v801
    %819 = vmatprep.subr.bf16.mxu0 0
    %820 = vmatpush1.bf16.msra.mxu0 %v803
    %821 = vmatprep.subr.bf16.mxu0 0
    %822 = vmatpush1.bf16.msra.mxu0 %v804
    %823 = vmatprep.subr.bf16.mxu0 0
    %824 = vmatpush1.bf16.msra.mxu0 %v805
    %825 = vmatprep.subr.bf16.mxu0 0
    %826 = vmatpush1.bf16.msra.mxu0 %v806
    %827 = vmatprep.subr.bf16.mxu0 0
    %828 = vmatpush1.bf16.msra.mxu0 %v807
    %829 = vmatprep.subr.bf16.mxu0 0
    %830 = vmatpush1.bf16.msra.mxu0 %v808
    %831 = vmatprep.subr.bf16.mxu0 0
    %832 = vmatpush1.bf16.msra.mxu0 %v809
    %833 = vmatprep.subr.bf16.mxu0 0
    %834 = vmatpush1.bf16.msra.mxu0 %v810
    %835 = vmatprep.subr.bf16.mxu0 0
    %836 = vmatpush1.bf16.msra.mxu0 0
    %837 = vmatprep.subr.bf16.mxu0 0
    %838 = vmatpush1.bf16.msra.mxu0 0
    %839 = vmatprep.subr.bf16.mxu0 0
    %840 = vmatpush1.bf16.msra.mxu0 0
    %841 = vmatprep.subr.bf16.mxu0 0
    %842 = vmatpush1.bf16.msra.mxu0 0
    %843 = vmatprep.subr.bf16.mxu0 0
    %844 = vmatpush1.bf16.msra.mxu0 0
    %845 = vmatprep.subr.bf16.mxu0 0
    %846 = vmatpush1.bf16.msra.mxu0 0
    %847 = vmatprep.subr.bf16.mxu0 0
    %848 = vmatpush1.bf16.msra.mxu0 0
    %849 = vmatprep.subr.bf16.mxu0 0
    %850 = vmatpush1.bf16.msra.mxu0 0
    %851 = vmatprep.mubr.bf16.mxu0 0
    %852 = vmatmul.mubr.bf16.gmra.mrb[0].mxu0 %v544
    %v853 = vpop.f32.mrb[0].mxu0
    %v854 = vadd.f32 0.0, %v853
    %v855 = vpop.f32.mrb[0].mxu0
    %v856 = vpop.f32.mrb[0].mxu0
    %v857 = vadd.f32 0.0, %v856
    %v858 = vpop.f32.mrb[0].mxu0
    %859 = vdwg.mxu0
    %v860 = vadd.f32 %v749, %v854
    %v861 = vadd.f32 %v752, %v857
    %v862 = vlaneseq
    %v863 = vshrl.u32 %v862, 7
    %v864 = vsub.s32 0, %v863
    %v865 = vrot.slane %v860, %v864
    %v866 = vsub.f32 %v860, %v865
    %v867 = vsub.f32 %v861, %v865
    %v868 = vmul.f32 %v866, %v406
    %v869 = vmul.f32 %v867, %v411
    %v870 = vadd.f32 %v868, %v869
    %v871 = vrot.slane %v870, 4
    %v872 = vadd.f32 %v870, %v871
    %v873 = vrot.slane %v872, 2
    %v874 = vadd.f32 %v872, %v873
    %v875 = vrot.slane %v874, 1
    %v876 = vadd.f32 %v874, %v875
    %v877 = vmul.f32 %v868, %v868
    %v878 = vmul.f32 %v869, %v869
    %v879 = vadd.f32 %v877, %v878
    %v880 = vrot.slane %v879, 4
    %v881 = vadd.f32 %v879, %v880
    %v882 = vrot.slane %v881, 2
    %v883 = vadd.f32 %v881, %v882
    %v884 = vrot.slane %v883, 1
    %v885 = vadd.f32 %v883, %v884
    %v886 = vmul.f32 %v876, 0.0625
    %v887 = vmul.f32 %v885, 0.0625
    %v888 = vmul.f32 %v886, %v886
    %v889 = vsub.f32 %v887, %v888
    %v890 = vld [vmem:[#allocation11] sm:$0x1]
    %v891 = vadd.f32 %v889, 1e-05
    %v892 = vrsqrt.pop %v891
    %v893 = vmul.f32 %v890, %v892
    %v894 = vld [vmem:[#allocation13] sm:$0x1]
    %v895 = vadd.f32 %v886, %v860
    %v896 = vmul.f32 %v895, %v893
    %v897 = vsub.f32 %v894, %v896
    %v899 = vlaneseq
    %v900 = vshrl.u32 %v899, 7
    %v901 = vsub.s32 0, %v900
    %v902 = vrot.slane %v893, %v901
    %v904 = vmul.f32 %v860, %v902
    %v905 = vmul.f32 %v861, %v902
    %v907 = vlaneseq
    %v908 = vshrl.u32 %v907, 7
    %v909 = vsub.s32 0, %v908
    %v910 = vrot.slane %v897, %v909
    %v912 = vadd.f32 %v904, %v910
    %v913 = vadd.f32 %v905, %v910
    %v914 = vmax.f32 %v912, 0.0
    %v915 = vmax.f32 %v913, 0.0
    %v916 = vpack.c.bf16 %v915, %v914
    %v917 = vunpack.c.l.bf16 %v916
    %v918 = vunpack.c.h.bf16 %v916
    %v919 = vrot.slane %v917, 7
    %v920 = vrot.slane %v918, 7
    %v921 = vsel %vm531, %v919, %v920
    %v922 = vsel %vm531, %v920, %v919
    %v923 = vmul.f32 %v922, %v382
    %v924 = vmul.f32 %v921, %v387
    %v925 = vpack.c.bf16 %v924, %v923
    %v926 = vrot.slane %v917, 1
    %v927 = vrot.slane %v918, 1
    %v928 = vsel %vm539, %v926, %v927
    %v929 = vsel %vm539, %v927, %v926
    %v930 = vmul.f32 %v928, %v394
    %v931 = vmul.f32 %v929, %v399
    %v932 = vpack.c.bf16 %v931, %v930
    %v933 = vld [vmem:[#allocation16] sm:$0xf]
    %v934 = vld [vmem:[#allocation16 + $0x4] sm:$0xf]
    %v935 = vld [vmem:[#allocation16 + $0x8] sm:$0xf]
    %v936 = vld [vmem:[#allocation16 + $0xc] sm:$0xf]
    %v937 = vld [vmem:[#allocation16 + $0x10] sm:$0xf]
    %v938 = vld [vmem:[#allocation16 + $0x14] sm:$0xf]
    %v939 = vld [vmem:[#allocation16 + $0x18] sm:$0xf]
    %v940 = vld [vmem:[#allocation16 + $0x1c] sm:$0xf]
    %v941 = vld [vmem:[#allocation16 + $0x20] sm:$0xf]
    %v942 = vld [vmem:[#allocation16 + $0x24] sm:$0xf]
    %v943 = vld [vmem:[#allocation16 + $0x28] sm:$0xf]
    %v944 = vld [vmem:[#allocation16 + $0x2c] sm:$0xf]
    %v945 = vld [vmem:[#allocation16 + $0x30] sm:$0xf]
    %v946 = vld [vmem:[#allocation16 + $0x34] sm:$0xf]
    %v947 = vld [vmem:[#allocation16 + $0x38] sm:$0xf]
    %v948 = vld [vmem:[#allocation16 + $0x3c] sm:$0xf]
    %v949 = vld [vmem:[#allocation14] sm:$0xf]
    %v950 = vld [vmem:[#allocation14 + $0x4] sm:$0xf]
    %v951 = vld [vmem:[#allocation14 + $0x8] sm:$0xf]
    %v952 = vld [vmem:[#allocation14 + $0xc] sm:$0xf]
    %v953 = vld [vmem:[#allocation14 + $0x10] sm:$0xf]
    %v954 = vld [vmem:[#allocation14 + $0x14] sm:$0xf]
    %v955 = vld [vmem:[#allocation14 + $0x18] sm:$0xf]
    %v956 = vld [vmem:[#allocation14 + $0x1c] sm:$0xf]
    %v957 = vld [vmem:[#allocation14 + $0x20] sm:$0xf]
    %v958 = vld [vmem:[#allocation14 + $0x24] sm:$0xf]
    %v959 = vld [vmem:[#allocation14 + $0x28] sm:$0xf]
    %v960 = vld [vmem:[#allocation14 + $0x2c] sm:$0xf]
    %v961 = vld [vmem:[#allocation14 + $0x30] sm:$0xf]
    %v962 = vld [vmem:[#allocation14 + $0x34] sm:$0xf]
    %v963 = vld [vmem:[#allocation14 + $0x38] sm:$0xf]
    %v964 = vld [vmem:[#allocation14 + $0x3c] sm:$0xf]
    %v981 = vunpack.c.l.b16 %v949
    %v982 = vunpack.c.l.b16 %v950
    %v983 = vunpack.c.l.b16 %v951
    %v984 = vunpack.c.l.b16 %v952
    %v985 = vunpack.c.l.b16 %v953
    %v986 = vunpack.c.l.b16 %v954
    %v987 = vunpack.c.l.b16 %v955
    %v988 = vunpack.c.l.b16 %v956
    %v989 = vunpack.c.l.b16 %v957
    %v990 = vunpack.c.l.b16 %v958
    %v991 = vunpack.c.l.b16 %v959
    %v992 = vunpack.c.l.b16 %v960
    %v993 = vunpack.c.l.b16 %v961
    %v994 = vunpack.c.l.b16 %v962
    %v995 = vunpack.c.l.b16 %v963
    %v996 = vunpack.c.l.b16 %v964
    %v997 = vpack.c.b16 %v982, %v981
    %v998 = vpack.c.b16 %v984, %v983
    %v999 = vpack.c.b16 %v986, %v985
    %v1000 = vpack.c.b16 %v988, %v987
    %v1001 = vpack.c.b16 %v990, %v989
    %v1002 = vpack.c.b16 %v992, %v991
    %v1003 = vpack.c.b16 %v994, %v993
    %v1004 = vpack.c.b16 %v996, %v995
    %1013 = vmatprep.subr.bf16.mxu0 0
    %1014 = vmatpush1.bf16.msra.mxu0 %v997
    %1015 = vmatprep.subr.bf16.mxu0 0
    %1016 = vmatpush1.bf16.msra.mxu0 %v998
    %1017 = vmatprep.subr.bf16.mxu0 0
    %1018 = vmatpush1.bf16.msra.mxu0 %v999
    %1019 = vmatprep.subr.bf16.mxu0 0
    %1020 = vmatpush1.bf16.msra.mxu0 %v1000
    %1021 = vmatprep.subr.bf16.mxu0 0
    %1022 = vmatpush1.bf16.msra.mxu0 %v1001
    %1023 = vmatprep.subr.bf16.mxu0 0
    %1024 = vmatpush1.bf16.msra.mxu0 %v1002
    %1025 = vmatprep.subr.bf16.mxu0 0
    %1026 = vmatpush1.bf16.msra.mxu0 %v1003
    %1027 = vmatprep.subr.bf16.mxu0 0
    %1028 = vmatpush1.bf16.msra.mxu0 %v1004
    %1029 = vmatprep.subr.bf16.mxu0 0
    %1030 = vmatpush1.bf16.msra.mxu0 0
    %1031 = vmatprep.subr.bf16.mxu0 0
    %1032 = vmatpush1.bf16.msra.mxu0 0
    %1033 = vmatprep.subr.bf16.mxu0 0
    %1034 = vmatpush1.bf16.msra.mxu0 0
    %1035 = vmatprep.subr.bf16.mxu0 0
    %1036 = vmatpush1.bf16.msra.mxu0 0
    %1037 = vmatprep.subr.bf16.mxu0 0
    %1038 = vmatpush1.bf16.msra.mxu0 0
    %1039 = vmatprep.subr.bf16.mxu0 0
    %1040 = vmatpush1.bf16.msra.mxu0 0
    %1041 = vmatprep.subr.bf16.mxu0 0
    %1042 = vmatpush1.bf16.msra.mxu0 0
    %1043 = vmatprep.subr.bf16.mxu0 0
    %1044 = vmatpush1.bf16.msra.mxu0 0
    %1045 = vmatprep.mubr.bf16.mxu0 0
    %1046 = vmatmul.mubr.bf16.gmra.mrb[0].mxu0 %v925
    %v1047 = vpop.f32.mrb[0].mxu0
    %v1048 = vadd.f32 0.0, %v1047
    %v1049 = vpop.f32.mrb[0].mxu0
    %v1050 = vpop.f32.mrb[0].mxu0
    %v1051 = vadd.f32 0.0, %v1050
    %v1052 = vpop.f32.mrb[0].mxu0
    %1053 = vdwg.mxu0
    %v1070 = vunpack.c.l.b16 %v933
    %v1071 = vunpack.c.l.b16 %v934
    %v1072 = vunpack.c.l.b16 %v935
    %v1073 = vunpack.c.l.b16 %v936
    %v1074 = vunpack.c.l.b16 %v937
    %v1075 = vunpack.c.l.b16 %v938
    %v1076 = vunpack.c.l.b16 %v939
    %v1077 = vunpack.c.l.b16 %v940
    %v1078 = vunpack.c.l.b16 %v941
    %v1079 = vunpack.c.l.b16 %v942
    %v1080 = vunpack.c.l.b16 %v943
    %v1081 = vunpack.c.l.b16 %v944
    %v1082 = vunpack.c.l.b16 %v945
    %v1083 = vunpack.c.l.b16 %v946
    %v1084 = vunpack.c.l.b16 %v947
    %v1085 = vunpack.c.l.b16 %v948
    %v1086 = vpack.c.b16 %v1071, %v1070
    %v1087 = vpack.c.b16 %v1073, %v1072
    %v1088 = vpack.c.b16 %v1075, %v1074
    %v1089 = vpack.c.b16 %v1077, %v1076
    %v1090 = vpack.c.b16 %v1079, %v1078
    %v1091 = vpack.c.b16 %v1081, %v1080
    %v1092 = vpack.c.b16 %v1083, %v1082
    %v1093 = vpack.c.b16 %v1085, %v1084
    %1102 = vmatprep.subr.bf16.mxu0 0
    %1103 = vmatpush1.bf16.msra.mxu0 %v1086
    %1104 = vmatprep.subr.bf16.mxu0 0
    %1105 = vmatpush1.bf16.msra.mxu0 %v1087
    %1106 = vmatprep.subr.bf16.mxu0 0
    %1107 = vmatpush1.bf16.msra.mxu0 %v1088
    %1108 = vmatprep.subr.bf16.mxu0 0
    %1109 = vmatpush1.bf16.msra.mxu0 %v1089
    %1110 = vmatprep.subr.bf16.mxu0 0
    %1111 = vmatpush1.bf16.msra.mxu0 %v1090
    %1112 = vmatprep.subr.bf16.mxu0 0
    %1113 = vmatpush1.bf16.msra.mxu0 %v1091
    %1114 = vmatprep.subr.bf16.mxu0 0
    %1115 = vmatpush1.bf16.msra.mxu0 %v1092
    %1116 = vmatprep.subr.bf16.mxu0 0
    %1117 = vmatpush1.bf16.msra.mxu0 %v1093
    %1118 = vmatprep.subr.bf16.mxu0 0
    %1119 = vmatpush1.bf16.msra.mxu0 0
    %1120 = vmatprep.subr.bf16.mxu0 0
    %1121 = vmatpush1.bf16.msra.mxu0 0
    %1122 = vmatprep.subr.bf16.mxu0 0
    %1123 = vmatpush1.bf16.msra.mxu0 0
    %1124 = vmatprep.subr.bf16.mxu0 0
    %1125 = vmatpush1.bf16.msra.mxu0 0
    %1126 = vmatprep.subr.bf16.mxu0 0
    %1127 = vmatpush1.bf16.msra.mxu0 0
    %1128 = vmatprep.subr.bf16.mxu0 0
    %1129 = vmatpush1.bf16.msra.mxu0 0
    %1130 = vmatprep.subr.bf16.mxu0 0
    %1131 = vmatpush1.bf16.msra.mxu0 0
    %1132 = vmatprep.subr.bf16.mxu0 0
    %1133 = vmatpush1.bf16.msra.mxu0 0
    %1134 = vmatprep.mubr.bf16.mxu0 0
    %1135 = vmatmul.mubr.bf16.gmra.mrb[0].mxu0 %v916
    %v1136 = vpop.f32.mrb[0].mxu0
    %v1137 = vadd.f32 %v1048, %v1136
    %v1138 = vpop.f32.mrb[0].mxu0
    %v1139 = vpop.f32.mrb[0].mxu0
    %v1140 = vadd.f32 %v1051, %v1139
    %v1141 = vpop.f32.mrb[0].mxu0
    %1142 = vdwg.mxu0
    %v1143 = vld [vmem:[#allocation17] sm:$0xf]
    %v1144 = vld [vmem:[#allocation17 + $0x4] sm:$0xf]
    %v1145 = vld [vmem:[#allocation17 + $0x8] sm:$0xf]
    %v1146 = vld [vmem:[#allocation17 + $0xc] sm:$0xf]
    %v1147 = vld [vmem:[#allocation17 + $0x10] sm:$0xf]
    %v1148 = vld [vmem:[#allocation17 + $0x14] sm:$0xf]
    %v1149 = vld [vmem:[#allocation17 + $0x18] sm:$0xf]
    %v1150 = vld [vmem:[#allocation17 + $0x1c] sm:$0xf]
    %v1151 = vld [vmem:[#allocation17 + $0x20] sm:$0xf]
    %v1152 = vld [vmem:[#allocation17 + $0x24] sm:$0xf]
    %v1153 = vld [vmem:[#allocation17 + $0x28] sm:$0xf]
    %v1154 = vld [vmem:[#allocation17 + $0x2c] sm:$0xf]
    %v1155 = vld [vmem:[#allocation17 + $0x30] sm:$0xf]
    %v1156 = vld [vmem:[#allocation17 + $0x34] sm:$0xf]
    %v1157 = vld [vmem:[#allocation17 + $0x38] sm:$0xf]
    %v1158 = vld [vmem:[#allocation17 + $0x3c] sm:$0xf]
    %v1175 = vunpack.c.l.b16 %v1143
    %v1176 = vunpack.c.l.b16 %v1144
    %v1177 = vunpack.c.l.b16 %v1145
    %v1178 = vunpack.c.l.b16 %v1146
    %v1179 = vunpack.c.l.b16 %v1147
    %v1180 = vunpack.c.l.b16 %v1148
    %v1181 = vunpack.c.l.b16 %v1149
    %v1182 = vunpack.c.l.b16 %v1150
    %v1183 = vunpack.c.l.b16 %v1151
    %v1184 = vunpack.c.l.b16 %v1152
    %v1185 = vunpack.c.l.b16 %v1153
    %v1186 = vunpack.c.l.b16 %v1154
    %v1187 = vunpack.c.l.b16 %v1155
    %v1188 = vunpack.c.l.b16 %v1156
    %v1189 = vunpack.c.l.b16 %v1157
    %v1190 = vunpack.c.l.b16 %v1158
    %v1191 = vpack.c.b16 %v1176, %v1175
    %v1192 = vpack.c.b16 %v1178, %v1177
    %v1193 = vpack.c.b16 %v1180, %v1179
    %v1194 = vpack.c.b16 %v1182, %v1181
    %v1195 = vpack.c.b16 %v1184, %v1183
    %v1196 = vpack.c.b16 %v1186, %v1185
    %v1197 = vpack.c.b16 %v1188, %v1187
    %v1198 = vpack.c.b16 %v1190, %v1189
    %1207 = vmatprep.subr.bf16.mxu0 0
    %1208 = vmatpush1.bf16.msra.mxu0 %v1191
    %1209 = vmatprep.subr.bf16.mxu0 0
    %1210 = vmatpush1.bf16.msra.mxu0 %v1192
    %1211 = vmatprep.subr.bf16.mxu0 0
    %1212 = vmatpush1.bf16.msra.mxu0 %v1193
    %1213 = vmatprep.subr.bf16.mxu0 0
    %1214 = vmatpush1.bf16.msra.mxu0 %v1194
    %1215 = vmatprep.subr.bf16.mxu0 0
    %1216 = vmatpush1.bf16.msra.mxu0 %v1195
    %1217 = vmatprep.subr.bf16.mxu0 0
    %1218 = vmatpush1.bf16.msra.mxu0 %v1196
    %1219 = vmatprep.subr.bf16.mxu0 0
    %1220 = vmatpush1.bf16.msra.mxu0 %v1197
    %1221 = vmatprep.subr.bf16.mxu0 0
    %1222 = vmatpush1.bf16.msra.mxu0 %v1198
    %1223 = vmatprep.subr.bf16.mxu0 0
    %1224 = vmatpush1.bf16.msra.mxu0 0
    %1225 = vmatprep.subr.bf16.mxu0 0
    %1226 = vmatpush1.bf16.msra.mxu0 0
    %1227 = vmatprep.subr.bf16.mxu0 0
    %1228 = vmatpush1.bf16.msra.mxu0 0
    %1229 = vmatprep.subr.bf16.mxu0 0
    %1230 = vmatpush1.bf16.msra.mxu0 0
    %1231 = vmatprep.subr.bf16.mxu0 0
    %1232 = vmatpush1.bf16.msra.mxu0 0
    %1233 = vmatprep.subr.bf16.mxu0 0
    %1234 = vmatpush1.bf16.msra.mxu0 0
    %1235 = vmatprep.subr.bf16.mxu0 0
    %1236 = vmatpush1.bf16.msra.mxu0 0
    %1237 = vmatprep.subr.bf16.mxu0 0
    %1238 = vmatpush1.bf16.msra.mxu0 0
    %1239 = vmatprep.mubr.bf16.mxu0 0
    %1240 = vmatmul.mubr.bf16.gmra.mrb[0].mxu0 %v932
    %v1241 = vpop.f32.mrb[0].mxu0
    %v1242 = vadd.f32 0.0, %v1241
    %v1243 = vpop.f32.mrb[0].mxu0
    %v1244 = vpop.f32.mrb[0].mxu0
    %v1245 = vadd.f32 0.0, %v1244
    %v1246 = vpop.f32.mrb[0].mxu0
    %1247 = vdwg.mxu0
    %v1248 = vadd.f32 %v1137, %v1242
    %v1249 = vadd.f32 %v1140, %v1245
    %v1250 = vlaneseq
    %v1251 = vshrl.u32 %v1250, 7
    %v1252 = vsub.s32 0, %v1251
    %v1253 = vrot.slane %v1248, %v1252
    %v1254 = vsub.f32 %v1248, %v1253
    %v1255 = vsub.f32 %v1249, %v1253
    %v1256 = vmul.f32 %v1254, %v406
    %v1257 = vmul.f32 %v1255, %v411
    %v1258 = vadd.f32 %v1256, %v1257
    %v1259 = vrot.slane %v1258, 4
    %v1260 = vadd.f32 %v1258, %v1259
    %v1261 = vrot.slane %v1260, 2
    %v1262 = vadd.f32 %v1260, %v1261
    %v1263 = vrot.slane %v1262, 1
    %v1264 = vadd.f32 %v1262, %v1263
    %v1265 = vmul.f32 %v1256, %v1256
    %v1266 = vmul.f32 %v1257, %v1257
    %v1267 = vadd.f32 %v1265, %v1266
    %v1268 = vrot.slane %v1267, 4
    %v1269 = vadd.f32 %v1267, %v1268
    %v1270 = vrot.slane %v1269, 2
    %v1271 = vadd.f32 %v1269, %v1270
    %v1272 = vrot.slane %v1271, 1
    %v1273 = vadd.f32 %v1271, %v1272
    %v1274 = vmul.f32 %v1264, 0.0625
    %v1275 = vmul.f32 %v1273, 0.0625
    %v1276 = vmul.f32 %v1274, %v1274
    %v1277 = vsub.f32 %v1275, %v1276
    %v1278 = vld [vmem:[#allocation19] sm:$0x1]
    %v1279 = vadd.f32 %v1277, 1e-05
    %v1280 = vrsqrt.pop %v1279
    %v1281 = vmul.f32 %v1278, %v1280
    %v1282 = vld [vmem:[#allocation20] sm:$0x1]
    %v1283 = vadd.f32 %v1274, %v1248
    %v1284 = vmul.f32 %v1283, %v1281
    %v1285 = vsub.f32 %v1282, %v1284
    %v1287 = vlaneseq
    %v1288 = vshrl.u32 %v1287, 7
    %v1289 = vsub.s32 0, %v1288
    %v1290 = vrot.slane %v1281, %v1289
    %v1292 = vmul.f32 %v1248, %v1290
    %v1293 = vmul.f32 %v1249, %v1290
    %v1295 = vlaneseq
    %v1296 = vshrl.u32 %v1295, 7
    %v1297 = vsub.s32 0, %v1296
    %v1298 = vrot.slane %v1285, %v1297
    %v1300 = vadd.f32 %v1292, %v1298
    %v1301 = vadd.f32 %v1293, %v1298
    %v1302 = vmax.f32 %v1300, 0.0
    %v1303 = vmax.f32 %v1301, 0.0
    %v1304 = vpack.c.bf16 %v1303, %v1302
    %v1305 = vadd.bf16 %v1304, %v524
    %v1306 = vmax.bf16 %v1305, 0
    %v1307 = vunpack.c.l.bf16 %v1306
    %v1308 = vunpack.c.h.bf16 %v1306
    %v1309 = vrot.slane %v1307, 7
    %v1310 = vrot.slane %v1308, 7
    %v1311 = vsel %vm531, %v1309, %v1310
    %v1312 = vsel %vm531, %v1310, %v1309
    %v1313 = vmul.f32 %v1312, %v382
    %v1314 = vmul.f32 %v1311, %v387
    %v1315 = vpack.c.bf16 %v1314, %v1313
    %v1316 = vrot.slane %v1307, 1
    %v1317 = vrot.slane %v1308, 1
    %v1318 = vsel %vm539, %v1316, %v1317
    %v1319 = vsel %vm539, %v1317, %v1316
    %v1320 = vmul.f32 %v1318, %v394
    %v1321 = vmul.f32 %v1319, %v399
    %v1322 = vpack.c.bf16 %v1321, %v1320
    %v1323 = vld [vmem:[#allocation23] sm:$0xf]
    %v1324 = vld [vmem:[#allocation23 + $0x4] sm:$0xf]
    %v1325 = vld [vmem:[#allocation23 + $0x8] sm:$0xf]
    %v1326 = vld [vmem:[#allocation23 + $0xc] sm:$0xf]
    %v1327 = vld [vmem:[#allocation23 + $0x10] sm:$0xf]
    %v1328 = vld [vmem:[#allocation23 + $0x14] sm:$0xf]
    %v1329 = vld [vmem:[#allocation23 + $0x18] sm:$0xf]
    %v1330 = vld [vmem:[#allocation23 + $0x1c] sm:$0xf]
    %v1331 = vld [vmem:[#allocation23 + $0x20] sm:$0xf]
    %v1332 = vld [vmem:[#allocation23 + $0x24] sm:$0xf]
    %v1333 = vld [vmem:[#allocation23 + $0x28] sm:$0xf]
    %v1334 = vld [vmem:[#allocation23 + $0x2c] sm:$0xf]
    %v1335 = vld [vmem:[#allocation23 + $0x30] sm:$0xf]
    %v1336 = vld [vmem:[#allocation23 + $0x34] sm:$0xf]
    %v1337 = vld [vmem:[#allocation23 + $0x38] sm:$0xf]
    %v1338 = vld [vmem:[#allocation23 + $0x3c] sm:$0xf]
    %v1339 = vld [vmem:[#allocation22] sm:$0xf]
    %v1340 = vld [vmem:[#allocation22 + $0x4] sm:$0xf]
    %v1341 = vld [vmem:[#allocation22 + $0x8] sm:$0xf]
    %v1342 = vld [vmem:[#allocation22 + $0xc] sm:$0xf]
    %v1343 = vld [vmem:[#allocation22 + $0x10] sm:$0xf]
    %v1344 = vld [vmem:[#allocation22 + $0x14] sm:$0xf]
    %v1345 = vld [vmem:[#allocation22 + $0x18] sm:$0xf]
    %v1346 = vld [vmem:[#allocation22 + $0x1c] sm:$0xf]
    %v1347 = vld [vmem:[#allocation22 + $0x20] sm:$0xf]
    %v1348 = vld [vmem:[#allocation22 + $0x24] sm:$0xf]
    %v1349 = vld [vmem:[#allocation22 + $0x28] sm:$0xf]
    %v1350 = vld [vmem:[#allocation22 + $0x2c] sm:$0xf]
    %v1351 = vld [vmem:[#allocation22 + $0x30] sm:$0xf]
    %v1352 = vld [vmem:[#allocation22 + $0x34] sm:$0xf]
    %v1353 = vld [vmem:[#allocation22 + $0x38] sm:$0xf]
    %v1354 = vld [vmem:[#allocation22 + $0x3c] sm:$0xf]
    %v1371 = vunpack.c.l.b16 %v1339
    %v1372 = vunpack.c.l.b16 %v1340
    %v1373 = vunpack.c.l.b16 %v1341
    %v1374 = vunpack.c.l.b16 %v1342
    %v1375 = vunpack.c.l.b16 %v1343
    %v1376 = vunpack.c.l.b16 %v1344
    %v1377 = vunpack.c.l.b16 %v1345
    %v1378 = vunpack.c.l.b16 %v1346
    %v1379 = vunpack.c.l.b16 %v1347
    %v1380 = vunpack.c.l.b16 %v1348
    %v1381 = vunpack.c.l.b16 %v1349
    %v1382 = vunpack.c.l.b16 %v1350
    %v1383 = vunpack.c.l.b16 %v1351
    %v1384 = vunpack.c.l.b16 %v1352
    %v1385 = vunpack.c.l.b16 %v1353
    %v1386 = vunpack.c.l.b16 %v1354
    %v1387 = vpack.c.b16 %v1372, %v1371
    %v1388 = vpack.c.b16 %v1374, %v1373
    %v1389 = vpack.c.b16 %v1376, %v1375
    %v1390 = vpack.c.b16 %v1378, %v1377
    %v1391 = vpack.c.b16 %v1380, %v1379
    %v1392 = vpack.c.b16 %v1382, %v1381
    %v1393 = vpack.c.b16 %v1384, %v1383
    %v1394 = vpack.c.b16 %v1386, %v1385
    %1403 = vmatprep.subr.bf16.mxu0 0
    %1404 = vmatpush1.bf16.msra.mxu0 %v1387
    %1405 = vmatprep.subr.bf16.mxu0 0
    %1406 = vmatpush1.bf16.msra.mxu0 %v1388
    %1407 = vmatprep.subr.bf16.mxu0 0
    %1408 = vmatpush1.bf16.msra.mxu0 %v1389
    %1409 = vmatprep.subr.bf16.mxu0 0
    %1410 = vmatpush1.bf16.msra.mxu0 %v1390
    %1411 = vmatprep.subr.bf16.mxu0 0
    %1412 = vmatpush1.bf16.msra.mxu0 %v1391
    %1413 = vmatprep.subr.bf16.mxu0 0
    %1414 = vmatpush1.bf16.msra.mxu0 %v1392
    %1415 = vmatprep.subr.bf16.mxu0 0
    %1416 = vmatpush1.bf16.msra.mxu0 %v1393
    %1417 = vmatprep.subr.bf16.mxu0 0
    %1418 = vmatpush1.bf16.msra.mxu0 %v1394
    %1419 = vmatprep.subr.bf16.mxu0 0
    %1420 = vmatpush1.bf16.msra.mxu0 0
    %1421 = vmatprep.subr.bf16.mxu0 0
    %1422 = vmatpush1.bf16.msra.mxu0 0
    %1423 = vmatprep.subr.bf16.mxu0 0
    %1424 = vmatpush1.bf16.msra.mxu0 0
    %1425 = vmatprep.subr.bf16.mxu0 0
    %1426 = vmatpush1.bf16.msra.mxu0 0
    %1427 = vmatprep.subr.bf16.mxu0 0
    %1428 = vmatpush1.bf16.msra.mxu0 0
    %1429 = vmatprep.subr.bf16.mxu0 0
    %1430 = vmatpush1.bf16.msra.mxu0 0
    %1431 = vmatprep.subr.bf16.mxu0 0
    %1432 = vmatpush1.bf16.msra.mxu0 0
    %1433 = vmatprep.subr.bf16.mxu0 0
    %1434 = vmatpush1.bf16.msra.mxu0 0
    %1435 = vmatprep.mubr.bf16.mxu0 0
    %1436 = vmatmul.mubr.bf16.gmra.mrb[0].mxu0 %v1315
    %v1437 = vpop.f32.mrb[0].mxu0
    %v1438 = vadd.f32 0.0, %v1437
    %v1439 = vpop.f32.mrb[0].mxu0
    %v1440 = vpop.f32.mrb[0].mxu0
    %v1441 = vadd.f32 0.0, %v1440
    %v1442 = vpop.f32.mrb[0].mxu0
    %1443 = vdwg.mxu0
    %v1460 = vunpack.c.l.b16 %v1323
    %v1461 = vunpack.c.l.b16 %v1324
    %v1462 = vunpack.c.l.b16 %v1325
    %v1463 = vunpack.c.l.b16 %v1326
    %v1464 = vunpack.c.l.b16 %v1327
    %v1465 = vunpack.c.l.b16 %v1328
    %v1466 = vunpack.c.l.b16 %v1329
    %v1467 = vunpack.c.l.b16 %v1330
    %v1468 = vunpack.c.l.b16 %v1331
    %v1469 = vunpack.c.l.b16 %v1332
    %v1470 = vunpack.c.l.b16 %v1333
    %v1471 = vunpack.c.l.b16 %v1334
    %v1472 = vunpack.c.l.b16 %v1335
    %v1473 = vunpack.c.l.b16 %v1336
    %v1474 = vunpack.c.l.b16 %v1337
    %v1475 = vunpack.c.l.b16 %v1338
    %v1476 = vpack.c.b16 %v1461, %v1460
    %v1477 = vpack.c.b16 %v1463, %v1462
    %v1478 = vpack.c.b16 %v1465, %v1464
    %v1479 = vpack.c.b16 %v1467, %v1466
    %v1480 = vpack.c.b16 %v1469, %v1468
    %v1481 = vpack.c.b16 %v1471, %v1470
    %v1482 = vpack.c.b16 %v1473, %v1472
    %v1483 = vpack.c.b16 %v1475, %v1474
    %1492 = vmatprep.subr.bf16.mxu0 0
    %1493 = vmatpush1.bf16.msra.mxu0 %v1476
    %1494 = vmatprep.subr.bf16.mxu0 0
    %1495 = vmatpush1.bf16.msra.mxu0 %v1477
    %1496 = vmatprep.subr.bf16.mxu0 0
    %1497 = vmatpush1.bf16.msra.mxu0 %v1478
    %1498 = vmatprep.subr.bf16.mxu0 0
    %1499 = vmatpush1.bf16.msra.mxu0 %v1479
    %1500 = vmatprep.subr.bf16.mxu0 0
    %1501 = vmatpush1.bf16.msra.mxu0 %v1480
    %1502 = vmatprep.subr.bf16.mxu0 0
    %1503 = vmatpush1.bf16.msra.mxu0 %v1481
    %1504 = vmatprep.subr.bf16.mxu0 0
    %1505 = vmatpush1.bf16.msra.mxu0 %v1482
    %1506 = vmatprep.subr.bf16.mxu0 0
    %1507 = vmatpush1.bf16.msra.mxu0 %v1483
    %1508 = vmatprep.subr.bf16.mxu0 0
    %1509 = vmatpush1.bf16.msra.mxu0 0
    %1510 = vmatprep.subr.bf16.mxu0 0
    %1511 = vmatpush1.bf16.msra.mxu0 0
    %1512 = vmatprep.subr.bf16.mxu0 0
    %1513 = vmatpush1.bf16.msra.mxu0 0
    %1514 = vmatprep.subr.bf16.mxu0 0
    %1515 = vmatpush1.bf16.msra.mxu0 0
    %1516 = vmatprep.subr.bf16.mxu0 0
    %1517 = vmatpush1.bf16.msra.mxu0 0
    %1518 = vmatprep.subr.bf16.mxu0 0
    %1519 = vmatpush1.bf16.msra.mxu0 0
    %1520 = vmatprep.subr.bf16.mxu0 0
    %1521 = vmatpush1.bf16.msra.mxu0 0
    %1522 = vmatprep.subr.bf16.mxu0 0
    %1523 = vmatpush1.bf16.msra.mxu0 0
    %1524 = vmatprep.mubr.bf16.mxu0 0
    %1525 = vmatmul.mubr.bf16.gmra.mrb[0].mxu0 %v1306
    %v1526 = vpop.f32.mrb[0].mxu0
    %v1527 = vadd.f32 %v1438, %v1526
    %v1528 = vpop.f32.mrb[0].mxu0
    %v1529 = vpop.f32.mrb[0].mxu0
    %v1530 = vadd.f32 %v1441, %v1529
    %v1531 = vpop.f32.mrb[0].mxu0
    %1532 = vdwg.mxu0
    %v1533 = vld [vmem:[#allocation25] sm:$0xf]
    %v1534 = vld [vmem:[#allocation25 + $0x4] sm:$0xf]
    %v1535 = vld [vmem:[#allocation25 + $0x8] sm:$0xf]
    %v1536 = vld [vmem:[#allocation25 + $0xc] sm:$0xf]
    %v1537 = vld [vmem:[#allocation25 + $0x10] sm:$0xf]
    %v1538 = vld [vmem:[#allocation25 + $0x14] sm:$0xf]
    %v1539 = vld [vmem:[#allocation25 + $0x18] sm:$0xf]
    %v1540 = vld [vmem:[#allocation25 + $0x1c] sm:$0xf]
    %v1541 = vld [vmem:[#allocation25 + $0x20] sm:$0xf]
    %v1542 = vld [vmem:[#allocation25 + $0x24] sm:$0xf]
    %v1543 = vld [vmem:[#allocation25 + $0x28] sm:$0xf]
    %v1544 = vld [vmem:[#allocation25 + $0x2c] sm:$0xf]
    %v1545 = vld [vmem:[#allocation25 + $0x30] sm:$0xf]
    %v1546 = vld [vmem:[#allocation25 + $0x34] sm:$0xf]
    %v1547 = vld [vmem:[#allocation25 + $0x38] sm:$0xf]
    %v1548 = vld [vmem:[#allocation25 + $0x3c] sm:$0xf]
    %v1565 = vunpack.c.l.b16 %v1533
    %v1566 = vunpack.c.l.b16 %v1534
    %v1567 = vunpack.c.l.b16 %v1535
    %v1568 = vunpack.c.l.b16 %v1536
    %v1569 = vunpack.c.l.b16 %v1537
    %v1570 = vunpack.c.l.b16 %v1538
    %v1571 = vunpack.c.l.b16 %v1539
    %v1572 = vunpack.c.l.b16 %v1540
    %v1573 = vunpack.c.l.b16 %v1541
    %v1574 = vunpack.c.l.b16 %v1542
    %v1575 = vunpack.c.l.b16 %v1543
    %v1576 = vunpack.c.l.b16 %v1544
    %v1577 = vunpack.c.l.b16 %v1545
    %v1578 = vunpack.c.l.b16 %v1546
    %v1579 = vunpack.c.l.b16 %v1547
    %v1580 = vunpack.c.l.b16 %v1548
    %v1581 = vpack.c.b16 %v1566, %v1565
    %v1582 = vpack.c.b16 %v1568, %v1567
    %v1583 = vpack.c.b16 %v1570, %v1569
    %v1584 = vpack.c.b16 %v1572, %v1571
    %v1585 = vpack.c.b16 %v1574, %v1573
    %v1586 = vpack.c.b16 %v1576, %v1575
    %v1587 = vpack.c.b16 %v1578, %v1577
    %v1588 = vpack.c.b16 %v1580, %v1579
    %1597 = vmatprep.subr.bf16.mxu0 0
    %1598 = vmatpush1.bf16.msra.mxu0 %v1581
    %1599 = vmatprep.subr.bf16.mxu0 0
    %1600 = vmatpush1.bf16.msra.mxu0 %v1582
    %1601 = vmatprep.subr.bf16.mxu0 0
    %1602 = vmatpush1.bf16.msra.mxu0 %v1583
    %1603 = vmatprep.subr.bf16.mxu0 0
    %1604 = vmatpush1.bf16.msra.mxu0 %v1584
    %1605 = vmatprep.subr.bf16.mxu0 0
    %1606 = vmatpush1.bf16.msra.mxu0 %v1585
    %1607 = vmatprep.subr.bf16.mxu0 0
    %1608 = vmatpush1.bf16.msra.mxu0 %v1586
    %1609 = vmatprep.subr.bf16.mxu0 0
    %1610 = vmatpush1.bf16.msra.mxu0 %v1587
    %1611 = vmatprep.subr.bf16.mxu0 0
    %1612 = vmatpush1.bf16.msra.mxu0 %v1588
    %1613 = vmatprep.subr.bf16.mxu0 0
    %1614 = vmatpush1.bf16.msra.mxu0 0
    %1615 = vmatprep.subr.bf16.mxu0 0
    %1616 = vmatpush1.bf16.msra.mxu0 0
    %1617 = vmatprep.subr.bf16.mxu0 0
    %1618 = vmatpush1.bf16.msra.mxu0 0
    %1619 = vmatprep.subr.bf16.mxu0 0
    %1620 = vmatpush1.bf16.msra.mxu0 0
    %1621 = vmatprep.subr.bf16.mxu0 0
    %1622 = vmatpush1.bf16.msra.mxu0 0
    %1623 = vmatprep.subr.bf16.mxu0 0
    %1624 = vmatpush1.bf16.msra.mxu0 0
    %1625 = vmatprep.subr.bf16.mxu0 0
    %1626 = vmatpush1.bf16.msra.mxu0 0
    %1627 = vmatprep.subr.bf16.mxu0 0
    %1628 = vmatpush1.bf16.msra.mxu0 0
    %1629 = vmatprep.mubr.bf16.mxu0 0
    %1630 = vmatmul.mubr.bf16.gmra.mrb[0].mxu0 %v1322
    %v1631 = vpop.f32.mrb[0].mxu0
    %v1632 = vadd.f32 0.0, %v1631
    %v1633 = vpop.f32.mrb[0].mxu0
    %v1634 = vpop.f32.mrb[0].mxu0
    %v1635 = vadd.f32 0.0, %v1634
    %v1636 = vpop.f32.mrb[0].mxu0
    %1637 = vdwg.mxu0
    %v1638 = vadd.f32 %v1527, %v1632
    %v1639 = vadd.f32 %v1530, %v1635
    %v1640 = vlaneseq
    %v1641 = vshrl.u32 %v1640, 7
    %v1642 = vsub.s32 0, %v1641
    %v1643 = vrot.slane %v1638, %v1642
    %v1644 = vsub.f32 %v1638, %v1643
    %v1645 = vsub.f32 %v1639, %v1643
    %v1646 = vmul.f32 %v1644, %v406
    %v1647 = vmul.f32 %v1645, %v411
    %v1648 = vadd.f32 %v1646, %v1647
    %v1649 = vrot.slane %v1648, 4
    %v1650 = vadd.f32 %v1648, %v1649
    %v1651 = vrot.slane %v1650, 2
    %v1652 = vadd.f32 %v1650, %v1651
    %v1653 = vrot.slane %v1652, 1
    %v1654 = vadd.f32 %v1652, %v1653
    %v1655 = vmul.f32 %v1646, %v1646
    %v1656 = vmul.f32 %v1647, %v1647
    %v1657 = vadd.f32 %v1655, %v1656
    %v1658 = vrot.slane %v1657, 4
    %v1659 = vadd.f32 %v1657, %v1658
    %v1660 = vrot.slane %v1659, 2
    %v1661 = vadd.f32 %v1659, %v1660
    %v1662 = vrot.slane %v1661, 1
    %v1663 = vadd.f32 %v1661, %v1662
    %v1664 = vmul.f32 %v1654, 0.0625
    %v1665 = vmul.f32 %v1663, 0.0625
    %v1666 = vmul.f32 %v1664, %v1664
    %v1667 = vsub.f32 %v1665, %v1666
    %v1668 = vld [vmem:[#allocation26] sm:$0x1]
    %v1669 = vadd.f32 %v1667, 1e-05
    %v1670 = vrsqrt.pop %v1669
    %v1671 = vmul.f32 %v1668, %v1670
    %v1672 = vld [vmem:[#allocation28] sm:$0x1]
    %v1673 = vadd.f32 %v1664, %v1638
    %v1674 = vmul.f32 %v1673, %v1671
    %v1675 = vsub.f32 %v1672, %v1674
    %v1677 = vlaneseq
    %v1678 = vshrl.u32 %v1677, 7
    %v1679 = vsub.s32 0, %v1678
    %v1680 = vrot.slane %v1671, %v1679
    %v1682 = vmul.f32 %v1638, %v1680
    %v1683 = vmul.f32 %v1639, %v1680
    %v1685 = vlaneseq
    %v1686 = vshrl.u32 %v1685, 7
    %v1687 = vsub.s32 0, %v1686
    %v1688 = vrot.slane %v1675, %v1687
    %v1690 = vadd.f32 %v1682, %v1688
    %v1691 = vadd.f32 %v1683, %v1688
    %v1692 = vmax.f32 %v1690, 0.0
    %v1693 = vmax.f32 %v1691, 0.0
    %v1694 = vpack.c.bf16 %v1693, %v1692
    %v1695 = vunpack.c.l.bf16 %v1694
    %v1696 = vunpack.c.h.bf16 %v1694
    %v1697 = vrot.slane %v1695, 7
    %v1698 = vrot.slane %v1696, 7
    %v1699 = vsel %vm531, %v1697, %v1698
    %v1700 = vsel %vm531, %v1698, %v1697
    %v1701 = vmul.f32 %v1700, %v382
    %v1702 = vmul.f32 %v1699, %v387
    %v1703 = vpack.c.bf16 %v1702, %v1701
    %v1704 = vrot.slane %v1695, 1
    %v1705 = vrot.slane %v1696, 1
    %v1706 = vsel %vm539, %v1704, %v1705
    %v1707 = vsel %vm539, %v1705, %v1704
    %v1708 = vmul.f32 %v1706, %v394
    %v1709 = vmul.f32 %v1707, %v399
    %v1710 = vpack.c.bf16 %v1709, %v1708
    %v1711 = vld [vmem:[#allocation29] sm:$0xf]
    %v1712 = vld [vmem:[#allocation29 + $0x4] sm:$0xf]
    %v1713 = vld [vmem:[#allocation29 + $0x8] sm:$0xf]
    %v1714 = vld [vmem:[#allocation29 + $0xc] sm:$0xf]
    %v1715 = vld [vmem:[#allocation29 + $0x10] sm:$0xf]
    %v1716 = vld [vmem:[#allocation29 + $0x14] sm:$0xf]
    %v1717 = vld [vmem:[#allocation29 + $0x18] sm:$0xf]
    %v1718 = vld [vmem:[#allocation29 + $0x1c] sm:$0xf]
    %v1719 = vld [vmem:[#allocation29 + $0x20] sm:$0xf]
    %v1720 = vld [vmem:[#allocation29 + $0x24] sm:$0xf]
    %v1721 = vld [vmem:[#allocation29 + $0x28] sm:$0xf]
    %v1722 = vld [vmem:[#allocation29 + $0x2c] sm:$0xf]
    %v1723 = vld [vmem:[#allocation29 + $0x30] sm:$0xf]
    %v1724 = vld [vmem:[#allocation29 + $0x34] sm:$0xf]
    %v1725 = vld [vmem:[#allocation29 + $0x38] sm:$0xf]
    %v1726 = vld [vmem:[#allocation29 + $0x3c] sm:$0xf]
    %v1727 = vld [vmem:[%s39] sm:$0xf]
    %v1728 = vld [vmem:[%s39 + $0x4] sm:$0xf]
    %v1729 = vld [vmem:[%s39 + $0x8] sm:$0xf]
    %v1730 = vld [vmem:[%s39 + $0xc] sm:$0xf]
    %v1731 = vld [vmem:[%s39 + $0x10] sm:$0xf]
    %v1732 = vld [vmem:[%s39 + $0x14] sm:$0xf]
    %v1733 = vld [vmem:[%s39 + $0x18] sm:$0xf]
    %v1734 = vld [vmem:[%s39 + $0x1c] sm:$0xf]
    %v1735 = vld [vmem:[%s39 + $0x20] sm:$0xf]
    %v1736 = vld [vmem:[%s39 + $0x24] sm:$0xf]
    %v1737 = vld [vmem:[%s39 + $0x28] sm:$0xf]
    %v1738 = vld [vmem:[%s39 + $0x2c] sm:$0xf]
    %v1739 = vld [vmem:[%s39 + $0x30] sm:$0xf]
    %v1740 = vld [vmem:[%s39 + $0x34] sm:$0xf]
    %v1741 = vld [vmem:[%s39 + $0x38] sm:$0xf]
    %v1742 = vld [vmem:[%s39 + $0x3c] sm:$0xf]
    %v1759 = vunpack.c.l.b16 %v1727
    %v1760 = vunpack.c.l.b16 %v1728
    %v1761 = vunpack.c.l.b16 %v1729
    %v1762 = vunpack.c.l.b16 %v1730
    %v1763 = vunpack.c.l.b16 %v1731
    %v1764 = vunpack.c.l.b16 %v1732
    %v1765 = vunpack.c.l.b16 %v1733
    %v1766 = vunpack.c.l.b16 %v1734
    %v1767 = vunpack.c.l.b16 %v1735
    %v1768 = vunpack.c.l.b16 %v1736
    %v1769 = vunpack.c.l.b16 %v1737
    %v1770 = vunpack.c.l.b16 %v1738
    %v1771 = vunpack.c.l.b16 %v1739
    %v1772 = vunpack.c.l.b16 %v1740
    %v1773 = vunpack.c.l.b16 %v1741
    %v1774 = vunpack.c.l.b16 %v1742
    %v1775 = vpack.c.b16 %v1760, %v1759
    %v1776 = vpack.c.b16 %v1762, %v1761
    %v1777 = vpack.c.b16 %v1764, %v1763
    %v1778 = vpack.c.b16 %v1766, %v1765
    %v1779 = vpack.c.b16 %v1768, %v1767
    %v1780 = vpack.c.b16 %v1770, %v1769
    %v1781 = vpack.c.b16 %v1772, %v1771
    %v1782 = vpack.c.b16 %v1774, %v1773
    %1791 = vmatprep.subr.bf16.mxu0 0
    %1792 = vmatpush1.bf16.msra.mxu0 %v1775
    %1793 = vmatprep.subr.bf16.mxu0 0
    %1794 = vmatpush1.bf16.msra.mxu0 %v1776
    %1795 = vmatprep.subr.bf16.mxu0 0
    %1796 = vmatpush1.bf16.msra.mxu0 %v1777
    %1797 = vmatprep.subr.bf16.mxu0 0
    %1798 = vmatpush1.bf16.msra.mxu0 %v1778
    %1799 = vmatprep.subr.bf16.mxu0 0
    %1800 = vmatpush1.bf16.msra.mxu0 %v1779
    %1801 = vmatprep.subr.bf16.mxu0 0
    %1802 = vmatpush1.bf16.msra.mxu0 %v1780
    %1803 = vmatprep.subr.bf16.mxu0 0
    %1804 = vmatpush1.bf16.msra.mxu0 %v1781
    %1805 = vmatprep.subr.bf16.mxu0 0
    %1806 = vmatpush1.bf16.msra.mxu0 %v1782
    %1807 = vmatprep.subr.bf16.mxu0 0
    %1808 = vmatpush1.bf16.msra.mxu0 0
    %1809 = vmatprep.subr.bf16.mxu0 0
    %1810 = vmatpush1.bf16.msra.mxu0 0
    %1811 = vmatprep.subr.bf16.mxu0 0
    %1812 = vmatpush1.bf16.msra.mxu0 0
    %1813 = vmatprep.subr.bf16.mxu0 0
    %1814 = vmatpush1.bf16.msra.mxu0 0
    %1815 = vmatprep.subr.bf16.mxu0 0
    %1816 = vmatpush1.bf16.msra.mxu0 0
    %1817 = vmatprep.subr.bf16.mxu0 0
    %1818 = vmatpush1.bf16.msra.mxu0 0
    %1819 = vmatprep.subr.bf16.mxu0 0
    %1820 = vmatpush1.bf16.msra.mxu0 0
    %1821 = vmatprep.subr.bf16.mxu0 0
    %1822 = vmatpush1.bf16.msra.mxu0 0
    %1823 = vmatprep.mubr.bf16.mxu0 0
    %1824 = vmatmul.mubr.bf16.gmra.mrb[0].mxu0 %v1703
    %v1825 = vpop.f32.mrb[0].mxu0
    %v1826 = vadd.f32 0.0, %v1825
    %v1827 = vpop.f32.mrb[0].mxu0
    %v1828 = vpop.f32.mrb[0].mxu0
    %v1829 = vadd.f32 0.0, %v1828
    %v1830 = vpop.f32.mrb[0].mxu0
    %1831 = vdwg.mxu0
    %v1848 = vunpack.c.l.b16 %v1711
    %v1849 = vunpack.c.l.b16 %v1712
    %v1850 = vunpack.c.l.b16 %v1713
    %v1851 = vunpack.c.l.b16 %v1714
    %v1852 = vunpack.c.l.b16 %v1715
    %v1853 = vunpack.c.l.b16 %v1716
    %v1854 = vunpack.c.l.b16 %v1717
    %v1855 = vunpack.c.l.b16 %v1718
    %v1856 = vunpack.c.l.b16 %v1719
    %v1857 = vunpack.c.l.b16 %v1720
    %v1858 = vunpack.c.l.b16 %v1721
    %v1859 = vunpack.c.l.b16 %v1722
    %v1860 = vunpack.c.l.b16 %v1723
    %v1861 = vunpack.c.l.b16 %v1724
    %v1862 = vunpack.c.l.b16 %v1725
    %v1863 = vunpack.c.l.b16 %v1726
    %v1864 = vpack.c.b16 %v1849, %v1848
    %v1865 = vpack.c.b16 %v1851, %v1850
    %v1866 = vpack.c.b16 %v1853, %v1852
    %v1867 = vpack.c.b16 %v1855, %v1854
    %v1868 = vpack.c.b16 %v1857, %v1856
    %v1869 = vpack.c.b16 %v1859, %v1858
    %v1870 = vpack.c.b16 %v1861, %v1860
    %v1871 = vpack.c.b16 %v1863, %v1862
    %1880 = vmatprep.subr.bf16.mxu0 0
    %1881 = vmatpush1.bf16.msra.mxu0 %v1864
    %1882 = vmatprep.subr.bf16.mxu0 0
    %1883 = vmatpush1.bf16.msra.mxu0 %v1865
    %1884 = vmatprep.subr.bf16.mxu0 0
    %1885 = vmatpush1.bf16.msra.mxu0 %v1866
    %1886 = vmatprep.subr.bf16.mxu0 0
    %1887 = vmatpush1.bf16.msra.mxu0 %v1867
    %1888 = vmatprep.subr.bf16.mxu0 0
    %1889 = vmatpush1.bf16.msra.mxu0 %v1868
    %1890 = vmatprep.subr.bf16.mxu0 0
    %1891 = vmatpush1.bf16.msra.mxu0 %v1869
    %1892 = vmatprep.subr.bf16.mxu0 0
    %1893 = vmatpush1.bf16.msra.mxu0 %v1870
    %1894 = vmatprep.subr.bf16.mxu0 0
    %1895 = vmatpush1.bf16.msra.mxu0 %v1871
    %1896 = vmatprep.subr.bf16.mxu0 0
    %1897 = vmatpush1.bf16.msra.mxu0 0
    %1898 = vmatprep.subr.bf16.mxu0 0
    %1899 = vmatpush1.bf16.msra.mxu0 0
    %1900 = vmatprep.subr.bf16.mxu0 0
    %1901 = vmatpush1.bf16.msra.mxu0 0
    %1902 = vmatprep.subr.bf16.mxu0 0
    %1903 = vmatpush1.bf16.msra.mxu0 0
    %1904 = vmatprep.subr.bf16.mxu0 0
    %1905 = vmatpush1.bf16.msra.mxu0 0
    %1906 = vmatprep.subr.bf16.mxu0 0
    %1907 = vmatpush1.bf16.msra.mxu0 0
    %1908 = vmatprep.subr.bf16.mxu0 0
    %1909 = vmatpush1.bf16.msra.mxu0 0
    %1910 = vmatprep.subr.bf16.mxu0 0
    %1911 = vmatpush1.bf16.msra.mxu0 0
    %1912 = vmatprep.mubr.bf16.mxu0 0
    %1913 = vmatmul.mubr.bf16.gmra.mrb[0].mxu0 %v1694
    %v1914 = vpop.f32.mrb[0].mxu0
    %v1915 = vadd.f32 %v1826, %v1914
    %v1916 = vpop.f32.mrb[0].mxu0
    %v1917 = vpop.f32.mrb[0].mxu0
    %v1918 = vadd.f32 %v1829, %v1917
    %v1919 = vpop.f32.mrb[0].mxu0
    %1920 = vdwg.mxu0
    %v1921 = vld [vmem:[#allocation31] sm:$0xf]
    %v1922 = vld [vmem:[#allocation31 + $0x4] sm:$0xf]
    %v1923 = vld [vmem:[#allocation31 + $0x8] sm:$0xf]
    %v1924 = vld [vmem:[#allocation31 + $0xc] sm:$0xf]
    %v1925 = vld [vmem:[#allocation31 + $0x10] sm:$0xf]
    %v1926 = vld [vmem:[#allocation31 + $0x14] sm:$0xf]
    %v1927 = vld [vmem:[#allocation31 + $0x18] sm:$0xf]
    %v1928 = vld [vmem:[#allocation31 + $0x1c] sm:$0xf]
    %v1929 = vld [vmem:[#allocation31 + $0x20] sm:$0xf]
    %v1930 = vld [vmem:[#allocation31 + $0x24] sm:$0xf]
    %v1931 = vld [vmem:[#allocation31 + $0x28] sm:$0xf]
    %v1932 = vld [vmem:[#allocation31 + $0x2c] sm:$0xf]
    %v1933 = vld [vmem:[#allocation31 + $0x30] sm:$0xf]
    %v1934 = vld [vmem:[#allocation31 + $0x34] sm:$0xf]
    %v1935 = vld [vmem:[#allocation31 + $0x38] sm:$0xf]
    %v1936 = vld [vmem:[#allocation31 + $0x3c] sm:$0xf]
    %v1953 = vunpack.c.l.b16 %v1921
    %v1954 = vunpack.c.l.b16 %v1922
    %v1955 = vunpack.c.l.b16 %v1923
    %v1956 = vunpack.c.l.b16 %v1924
    %v1957 = vunpack.c.l.b16 %v1925
    %v1958 = vunpack.c.l.b16 %v1926
    %v1959 = vunpack.c.l.b16 %v1927
    %v1960 = vunpack.c.l.b16 %v1928
    %v1961 = vunpack.c.l.b16 %v1929
    %v1962 = vunpack.c.l.b16 %v1930
    %v1963 = vunpack.c.l.b16 %v1931
    %v1964 = vunpack.c.l.b16 %v1932
    %v1965 = vunpack.c.l.b16 %v1933
    %v1966 = vunpack.c.l.b16 %v1934
    %v1967 = vunpack.c.l.b16 %v1935
    %v1968 = vunpack.c.l.b16 %v1936
    %v1969 = vpack.c.b16 %v1954, %v1953
    %v1970 = vpack.c.b16 %v1956, %v1955
    %v1971 = vpack.c.b16 %v1958, %v1957
    %v1972 = vpack.c.b16 %v1960, %v1959
    %v1973 = vpack.c.b16 %v1962, %v1961
    %v1974 = vpack.c.b16 %v1964, %v1963
    %v1975 = vpack.c.b16 %v1966, %v1965
    %v1976 = vpack.c.b16 %v1968, %v1967
    %1985 = vmatprep.subr.bf16.mxu0 0
    %1986 = vmatpush1.bf16.msra.mxu0 %v1969
    %1987 = vmatprep.subr.bf16.mxu0 0
    %1988 = vmatpush1.bf16.msra.mxu0 %v1970
    %1989 = vmatprep.subr.bf16.mxu0 0
    %1990 = vmatpush1.bf16.msra.mxu0 %v1971
    %1991 = vmatprep.subr.bf16.mxu0 0
    %1992 = vmatpush1.bf16.msra.mxu0 %v1972
    %1993 = vmatprep.subr.bf16.mxu0 0
    %1994 = vmatpush1.bf16.msra.mxu0 %v1973
    %1995 = vmatprep.subr.bf16.mxu0 0
    %1996 = vmatpush1.bf16.msra.mxu0 %v1974
    %1997 = vmatprep.subr.bf16.mxu0 0
    %1998 = vmatpush1.bf16.msra.mxu0 %v1975
    %1999 = vmatprep.subr.bf16.mxu0 0
    %2000 = vmatpush1.bf16.msra.mxu0 %v1976
    %2001 = vmatprep.subr.bf16.mxu0 0
    %2002 = vmatpush1.bf16.msra.mxu0 0
    %2003 = vmatprep.subr.bf16.mxu0 0
    %2004 = vmatpush1.bf16.msra.mxu0 0
    %2005 = vmatprep.subr.bf16.mxu0 0
    %2006 = vmatpush1.bf16.msra.mxu0 0
    %2007 = vmatprep.subr.bf16.mxu0 0
    %2008 = vmatpush1.bf16.msra.mxu0 0
    %2009 = vmatprep.subr.bf16.mxu0 0
    %2010 = vmatpush1.bf16.msra.mxu0 0
    %2011 = vmatprep.subr.bf16.mxu0 0
    %2012 = vmatpush1.bf16.msra.mxu0 0
    %2013 = vmatprep.subr.bf16.mxu0 0
    %2014 = vmatpush1.bf16.msra.mxu0 0
    %2015 = vmatprep.subr.bf16.mxu0 0
    %2016 = vmatpush1.bf16.msra.mxu0 0
    %2017 = vmatprep.mubr.bf16.mxu0 0
    %2018 = vmatmul.mubr.bf16.gmra.mrb[0].mxu0 %v1710
    %v2019 = vpop.f32.mrb[0].mxu0
    %v2020 = vadd.f32 0.0, %v2019
    %v2021 = vpop.f32.mrb[0].mxu0
    %v2022 = vpop.f32.mrb[0].mxu0
    %v2023 = vadd.f32 0.0, %v2022
    %v2024 = vpop.f32.mrb[0].mxu0
    %2025 = vdwg.mxu0
    %v2026 = vadd.f32 %v1915, %v2020
    %v2027 = vadd.f32 %v1918, %v2023
    %v2028 = vlaneseq
    %v2029 = vshrl.u32 %v2028, 7
    %v2030 = vsub.s32 0, %v2029
    %v2031 = vrot.slane %v2026, %v2030
    %v2032 = vsub.f32 %v2026, %v2031
    %v2033 = vsub.f32 %v2027, %v2031
    %v2034 = vmul.f32 %v2032, %v406
    %v2035 = vmul.f32 %v2033, %v411
    %v2036 = vadd.f32 %v2034, %v2035
    %v2037 = vrot.slane %v2036, 4
    %v2038 = vadd.f32 %v2036, %v2037
    %v2039 = vrot.slane %v2038, 2
    %v2040 = vadd.f32 %v2038, %v2039
    %v2041 = vrot.slane %v2040, 1
    %v2042 = vadd.f32 %v2040, %v2041
    %v2043 = vmul.f32 %v2034, %v2034
    %v2044 = vmul.f32 %v2035, %v2035
    %v2045 = vadd.f32 %v2043, %v2044
    %v2046 = vrot.slane %v2045, 4
    %v2047 = vadd.f32 %v2045, %v2046
    %v2048 = vrot.slane %v2047, 2
    %v2049 = vadd.f32 %v2047, %v2048
    %v2050 = vrot.slane %v2049, 1
    %v2051 = vadd.f32 %v2049, %v2050
    %v2052 = vmul.f32 %v2042, 0.0625
    %v2053 = vmul.f32 %v2051, 0.0625
    %v2054 = vmul.f32 %v2052, %v2052
    %v2055 = vsub.f32 %v2053, %v2054
    %v2056 = vld [vmem:[%s45] sm:$0x1]
    %v2057 = vadd.f32 %v2055, 1e-05
    %v2058 = vrsqrt.pop %v2057
    %v2059 = vmul.f32 %v2056, %v2058
    %v2060 = vld [vmem:[%s47] sm:$0x1]
    %v2061 = vadd.f32 %v2052, %v2026
    %v2062 = vmul.f32 %v2061, %v2059
    %v2063 = vsub.f32 %v2060, %v2062
    %v2065 = vlaneseq
    %v2066 = vshrl.u32 %v2065, 7
    %v2067 = vsub.s32 0, %v2066
    %v2068 = vrot.slane %v2059, %v2067
    %v2070 = vmul.f32 %v2026, %v2068
    %v2071 = vmul.f32 %v2027, %v2068
    %v2073 = vlaneseq
    %v2074 = vshrl.u32 %v2073, 7
    %v2075 = vsub.s32 0, %v2074
    %v2076 = vrot.slane %v2063, %v2075
    %v2078 = vadd.f32 %v2070, %v2076
    %v2079 = vadd.f32 %v2071, %v2076
    %v2080 = vmax.f32 %v2078, 0.0
    %v2081 = vmax.f32 %v2079, 0.0
    %v2082 = vpack.c.bf16 %v2081, %v2080
    %v2083 = vadd.bf16 %v2082, %v1306
    %v2084 = vmax.bf16 %v2083, 0
    %v2085 = vunpack.c.l.bf16 %v2084
    %v2086 = vunpack.c.h.bf16 %v2084
    %v2087 = vmul.f32 %v2085, %v406
    %v2088 = vmul.f32 %v2086, %v411
    %v2089 = vrot.slane %v2087, 4
    %v2090 = vadd.f32 %v2087, %v2089
    %v2091 = vrot.slane %v2090, 2
    %v2092 = vadd.f32 %v2090, %v2091
    %v2093 = vrot.slane %v2092, 1
    %v2094 = vadd.f32 %v2092, %v2093
    %v2095 = vrot.slane %v2088, 4
    %v2096 = vadd.f32 %v2088, %v2095
    %v2097 = vrot.slane %v2096, 2
    %v2098 = vadd.f32 %v2096, %v2097
    %v2099 = vrot.slane %v2098, 1
    %v2100 = vadd.f32 %v2098, %v2099
    %v2101 = vmul.f32 %v2094, 0.125
    %v2102 = vmul.f32 %v2100, 0.125
    %v2103 = vpack.c.bf16 %v2101, %v2101
    %v2104 = vpack.c.bf16 %v2102, %v2102
    %v2105 = vld [vmem:[#allocation32] sm:$0xf]
    %v2106 = vld [vmem:[#allocation32 + $0x4] sm:$0xf]
    %v2107 = vld [vmem:[#allocation32 + $0x8] sm:$0xf]
    %v2108 = vld [vmem:[#allocation32 + $0xc] sm:$0xf]
    %v2109 = vld [vmem:[#allocation32 + $0x10] sm:$0xf]
    %v2110 = vld [vmem:[#allocation32 + $0x14] sm:$0xf]
    %v2111 = vld [vmem:[#allocation32 + $0x18] sm:$0xf]
    %v2112 = vld [vmem:[#allocation32 + $0x1c] sm:$0xf]
    %v2113 = vld [vmem:[#allocation32 + $0x20] sm:$0xf]
    %v2114 = vld [vmem:[#allocation32 + $0x24] sm:$0xf]
    %v2115 = vld [vmem:[#allocation32 + $0x28] sm:$0xf]
    %v2116 = vld [vmem:[#allocation32 + $0x2c] sm:$0xf]
    %v2117 = vld [vmem:[#allocation32 + $0x30] sm:$0xf]
    %v2118 = vld [vmem:[#allocation32 + $0x34] sm:$0xf]
    %v2119 = vld [vmem:[#allocation32 + $0x38] sm:$0xf]
    %v2120 = vld [vmem:[#allocation32 + $0x3c] sm:$0xf]
    %v2121 = vld [vmem:[%s51] sm:$0x1]
    %v2123 = vlaneseq
    %v2124 = vshrl.u32 %v2123, 7
    %v2125 = vsub.s32 0, %v2124
    %v2126 = vrot.slane %v2121, %v2125
    %v2130 = vunpack.c.l.b16 %v2103
    %v2131 = vunpack.c.l.b16 %v2104
    %vm2132 = vcmask 1041409
    %v2133 = vsel %vm2132, %v2131, %v2130
    %v2134 = vpack.c.b16 %v2133, %v2133
    %v2152 = vunpack.c.l.b16 %v2105
    %v2153 = vunpack.c.l.b16 %v2106
    %v2154 = vunpack.c.l.b16 %v2107
    %v2155 = vunpack.c.l.b16 %v2108
    %v2156 = vunpack.c.l.b16 %v2109
    %v2157 = vunpack.c.l.b16 %v2110
    %v2158 = vunpack.c.l.b16 %v2111
    %v2159 = vunpack.c.l.b16 %v2112
    %v2160 = vunpack.c.l.b16 %v2113
    %v2161 = vunpack.c.l.b16 %v2114
    %v2162 = vunpack.c.l.b16 %v2115
    %v2163 = vunpack.c.l.b16 %v2116
    %v2164 = vunpack.c.l.b16 %v2117
    %v2165 = vunpack.c.l.b16 %v2118
    %v2166 = vunpack.c.l.b16 %v2119
    %v2167 = vunpack.c.l.b16 %v2120
    %v2168 = vpack.c.b16 %v2153, %v2152
    %v2169 = vpack.c.b16 %v2155, %v2154
    %v2170 = vpack.c.b16 %v2157, %v2156
    %v2171 = vpack.c.b16 %v2159, %v2158
    %v2172 = vpack.c.b16 %v2161, %v2160
    %v2173 = vpack.c.b16 %v2163, %v2162
    %v2174 = vpack.c.b16 %v2165, %v2164
    %v2175 = vpack.c.b16 %v2167, %v2166
    %2184 = vmatprep.subr.bf16.mxu0 0
    %2185 = vmatpush1.bf16.msra.mxu0 %v2168
    %2186 = vmatprep.subr.bf16.mxu0 0
    %2187 = vmatpush1.bf16.msra.mxu0 %v2169
    %2188 = vmatprep.subr.bf16.mxu0 0
    %2189 = vmatpush1.bf16.msra.mxu0 %v2170
    %2190 = vmatprep.subr.bf16.mxu0 0
    %2191 = vmatpush1.bf16.msra.mxu0 %v2171
    %2192 = vmatprep.subr.bf16.mxu0 0
    %2193 = vmatpush1.bf16.msra.mxu0 %v2172
    %2194 = vmatprep.subr.bf16.mxu0 0
    %2195 = vmatpush1.bf16.msra.mxu0 %v2173
    %2196 = vmatprep.subr.bf16.mxu0 0
    %2197 = vmatpush1.bf16.msra.mxu0 %v2174
    %2198 = vmatprep.subr.bf16.mxu0 0
    %2199 = vmatpush1.bf16.msra.mxu0 %v2175
    %2200 = vmatprep.subr.bf16.mxu0 0
    %2201 = vmatpush1.bf16.msra.mxu0 0
    %2202 = vmatprep.subr.bf16.mxu0 0
    %2203 = vmatpush1.bf16.msra.mxu0 0
    %2204 = vmatprep.subr.bf16.mxu0 0
    %2205 = vmatpush1.bf16.msra.mxu0 0
    %2206 = vmatprep.subr.bf16.mxu0 0
    %2207 = vmatpush1.bf16.msra.mxu0 0
    %2208 = vmatprep.subr.bf16.mxu0 0
    %2209 = vmatpush1.bf16.msra.mxu0 0
    %2210 = vmatprep.subr.bf16.mxu0 0
    %2211 = vmatpush1.bf16.msra.mxu0 0
    %2212 = vmatprep.subr.bf16.mxu0 0
    %2213 = vmatpush1.bf16.msra.mxu0 0
    %2214 = vmatprep.subr.bf16.mxu0 0
    %2215 = vmatpush1.bf16.msra.mxu0 0
    %2216 = vmatprep.mubr.bf16.mxu0 0
    %2217 = vmatmul.mubr.bf16.gmra.mrb[0].mxu0 %v2134
    %v2218 = vpop.f32.mrb[0].mxu0
    %v2219 = vadd.f32 %v2126, %v2218
    %v2220 = vpop.f32.mrb[0].mxu0
    %v2221 = vpop.f32.mrb[0].mxu0
    %v2222 = vpop.f32.mrb[0].mxu0
    %2223 = vdwg.mxu0
    %2224 = vst [vmem:[#allocation34] sm:$0x3] %v2219
    // Predicated region
    $region198: #{tpu_custom_call.1} parent=1 // pred_check
      _
    $region199: #{tpu_custom_call.1} parent=1 // pred_check_branch
      %2226 = sbr.rel (0) target = $region201
    $region200: #{tpu_custom_call.1} parent=1 // pred_region
      %s2228 = ssub.s32 32, 32
      %2229 = vsyncadd [#allocation4], %s2228
      %s2231 = sshll.u32 [#allocation34], 4
      %s2232 = int_to_ptr.vmem [resolvable:$true] %s2231
      %2234 = dma.vmem_to_hbm [thread:$0]  %s2232, 32, %s59, [#allocation4]
    $region201: #{tpu_custom_call.1} parent=1 // pred_fallthru
      _
    // Predicated region
    $region202: #{tpu_custom_call.1} parent=1 // pred_check
      _
    $region203: #{tpu_custom_call.1} parent=1 // pred_check_branch
      %2236 = sbr.rel (0) target = $region205
    $region204: #{tpu_custom_call.1} parent=1 // pred_region
      %2237 = dma.done [#allocation4], 32
    $region205: #{tpu_custom_call.1} parent=1 // pred_fallthru
      _
    %2238 = vsyncpa [#allocation3], 1
    %2239 = vsyncpa [#allocation6], 1
    %2240 = vsyncpa [#allocation9], 1
    %2241 = vsyncpa [#allocation12], 1
    %2242 = vsyncpa [#allocation15], 1
    %2243 = vsyncpa [#allocation18], 1
    %2244 = vsyncpa [#allocation21], 1
    %2245 = vsyncpa [#allocation24], 1
    %2246 = vsyncpa [#allocation27], 1
    %2247 = vsyncpa [#allocation30], 1
    %2248 = vsyncpa [#allocation33], 1
    %2249 = vsyncpa [#allocation4], 1

</llo_original>
